<compile_context>
chip_gen: v7x
topology: tpu7x:2x2x1
jax: 0.10.0
libtpu: 0.0.40
codegen_flags: <defaults>
</compile_context>

<pallas_src>
import jax
import jax.numpy as jnp
from jax import lax
from jax.experimental import pallas as pl
from jax.experimental.pallas import tpu as pltpu


def _round_up(x, m):
    return -(-int(x) // m) * m


# ---------------------------------------------------------------------------
# Fast path: tables resident in VMEM, one-hot gather on the MXU, lane-dense out.
# ---------------------------------------------------------------------------
def gmf_vmem_kernel(uid_ref, iid_ref,          # (1, 1, tile_b) int32 id blocks
                    u_tblT_ref, i_tblT_ref,    # (D, num_users) / (D, num_items), resident VMEM
                    w_ref, b_ref,              # (1, D) weight row (VMEM), (1,) bias (SMEM)
                    out_ref):                  # (1, 1, tile_b) lane-dense output block
    f32 = jnp.float32
    hi = lax.Precision.HIGHEST
    _, nu = u_tblT_ref.shape
    _, ni = i_tblT_ref.shape
    tile_b = out_ref.shape[-1]

    uid = uid_ref[0]                           # (1, tile_b) int32
    iid = iid_ref[0]

    # One-hot gather, transposed so the batch lives on lanes end-to-end.
    u_oh = (lax.broadcasted_iota(jnp.int32, (nu, tile_b), 0) == uid).astype(f32)
    i_oh = (lax.broadcasted_iota(jnp.int32, (ni, tile_b), 0) == iid).astype(f32)
    u_t = jnp.dot(u_tblT_ref[...].astype(f32), u_oh, precision=hi,
                  preferred_element_type=f32)              # (D, tile_b)
    i_t = jnp.dot(i_tblT_ref[...].astype(f32), i_oh, precision=hi,
                  preferred_element_type=f32)              # (D, tile_b)

    prod_t = u_t * i_t                                     # (D, tile_b)  VPU
    logits = jnp.dot(w_ref[...], prod_t, precision=hi,
                     preferred_element_type=f32) + b_ref[0]  # (1, tile_b)  MXU
    out_ref[0] = 1.0 / (1.0 + jnp.exp(-logits))            # exp on EUP


def _gmf_forward_vmem_tables(uid, iid, user_emb, item_emb, w_row, b_vec, tile_b, B):
    num_users, D = user_emb.shape
    num_items, _ = item_emb.shape
    n_tiles = pl.cdiv(B, tile_b)
    b_pad = n_tiles * tile_b

    uid_p = jnp.zeros((b_pad,), jnp.int32).at[:B].set(uid).reshape(n_tiles, 1, tile_b)
    iid_p = jnp.zeros((b_pad,), jnp.int32).at[:B].set(iid).reshape(n_tiles, 1, tile_b)
    u_tblT = jnp.asarray(user_emb).T            # (D, num_users)
    i_tblT = jnp.asarray(item_emb).T            # (D, num_items)

    grid_spec = pltpu.PrefetchScalarGridSpec(
        num_scalar_prefetch=0,
        grid=(n_tiles,),
        in_specs=[
            pl.BlockSpec((1, 1, tile_b), lambda t: (t, 0, 0)),     # user ids
            pl.BlockSpec((1, 1, tile_b), lambda t: (t, 0, 0)),     # item ids
            pl.BlockSpec((D, num_users), lambda t: (0, 0)),        # user table^T, resident
            pl.BlockSpec((D, num_items), lambda t: (0, 0)),        # item table^T, resident
            pl.BlockSpec((1, D), lambda t: (0, 0)),                # weight row, resident
            pl.BlockSpec(memory_space=pltpu.MemorySpace.SMEM),     # bias scalar
        ],
        out_specs=pl.BlockSpec((1, 1, tile_b), lambda t: (t, 0, 0)),
    )
    out = pl.pallas_call(
        gmf_vmem_kernel,
        grid_spec=grid_spec,
        out_shape=jax.ShapeDtypeStruct((n_tiles, 1, tile_b), jnp.float32),
        compiler_params=pltpu.CompilerParams(
            dimension_semantics=("parallel",)),   # independent tiles -> v7x 2 TCs
    )(uid_p, iid_p, u_tblT, i_tblT, w_row, b_vec)
    return out.reshape(b_pad, 1)[:B]


# ---------------------------------------------------------------------------
# HBM path: per-row DMA gather, double-buffered across batch tiles.
# ---------------------------------------------------------------------------
def gmf_hbm_kernel(uid_ref, iid_ref,           # scalar prefetch: int32 ids in SMEM
                   u_tbl, i_tbl,               # embedding tables, raw HBM refs
                   w_ref, b_ref,               # (1, D) weight row (VMEM), (1,) bias (SMEM)
                   out_ref,                    # (tile_b, 1) output block
                   u_buf, i_buf, sem):         # (2, tile_b, D) VMEM x2, DMA sems (2, 2)
    c = pl.program_id(0)
    t = pl.program_id(1)
    tps = pl.num_programs(1)
    tile_b = out_ref.shape[0]
    slot = lax.rem(t, 2)

    def issue_gather(tile_idx, s):
        # One row DMA per sample per table into buffer slot `s` / semaphores sem[s, :].
        base = (c * tps + tile_idx) * tile_b

        def body(r, carry):
            u_id = uid_ref[base + r]
            i_id = iid_ref[base + r]
            pltpu.make_async_copy(u_tbl.at[pl.ds(u_id, 1), :],
                                  u_buf.at[s, pl.ds(r, 1), :],
                                  sem.at[s, 0]).start()
            pltpu.make_async_copy(i_tbl.at[pl.ds(i_id, 1), :],
                                  i_buf.at[s, pl.ds(r, 1), :],
                                  sem.at[s, 1]).start()
            return carry

        # Unrolled so id loads + descriptor pushes pipeline on the scalar/misc slots.
        lax.fori_loop(0, tile_b, body, 0, unroll=8)

    @pl.when(t == 0)                 # prime this split's first tile into slot 0
    def _():
        issue_gather(0, 0)

    @pl.when(t + 1 < tps)            # prefetch next tile into the other slot
    def _():
        issue_gather(t + 1, 1 - slot)

    # One wait per table: a never-started, full-tile-sized descriptor drains the
    # byte-counted DMA semaphore exactly when all of this slot's row copies
    # landed (each table drained against its own buffer -> dtype/D safe).
    pltpu.make_async_copy(u_buf.at[slot], u_buf.at[slot], sem.at[slot, 0]).wait()
    pltpu.make_async_copy(i_buf.at[slot], i_buf.at[slot], sem.at[slot, 1]).wait()

    # GMF head: VPU multiply, XLU lane-reduce, EUP exp (N=1 would waste the MXU).
    u = u_buf[slot].astype(jnp.float32)                    # (tile_b, D)
    v = i_buf[slot].astype(jnp.float32)
    prod = u * v * w_ref[...]                              # (1, D) weight row broadcasts
    logits = jnp.sum(prod, axis=-1, keepdims=True) + b_ref[0]   # (tile_b, 1)
    out_ref[...] = (1.0 / (1.0 + jnp.exp(-logits))).astype(out_ref.dtype)


def _gmf_forward_hbm_gather(uid, iid, user_emb, item_emb, w_row, b_vec, tile_b, B):
    _, D = user_emb.shape

    n_tiles = pl.cdiv(B, tile_b)
    # Two grid "splits" so v7x can put one on each TensorCore while the inner
    # (sequential) axis carries the double-buffered gather scratch.
    n_splits = 2 if n_tiles >= 2 else 1
    tps = pl.cdiv(n_tiles, n_splits)
    n_tiles = n_splits * tps
    b_pad = n_tiles * tile_b

    uid_p = jnp.zeros((b_pad,), jnp.int32).at[:B].set(uid)
    iid_p = jnp.zeros((b_pad,), jnp.int32).at[:B].set(iid)

    grid_spec = pltpu.PrefetchScalarGridSpec(
        num_scalar_prefetch=2,                              # uid, iid -> SMEM
        grid=(n_splits, tps),
        in_specs=[
            pl.BlockSpec(memory_space=pl.ANY),              # user table (stays in HBM)
            pl.BlockSpec(memory_space=pl.ANY),              # item table (stays in HBM)
            pl.BlockSpec((1, D), lambda c, t, u_ids, i_ids: (0, 0)),   # weight row
            pl.BlockSpec(memory_space=pltpu.MemorySpace.SMEM),         # bias scalar
        ],
        out_specs=pl.BlockSpec((tile_b, 1),
                               lambda c, t, u_ids, i_ids: (c * tps + t, 0)),
        scratch_shapes=[
            pltpu.VMEM((2, tile_b, D), user_emb.dtype),     # double-buffered user rows
            pltpu.VMEM((2, tile_b, D), item_emb.dtype),     # double-buffered item rows
            pltpu.SemaphoreType.DMA((2, 2)),                # [slot, table] gather sems
        ],
    )
    out = pl.pallas_call(
        gmf_hbm_kernel,
        grid_spec=grid_spec,
        out_shape=jax.ShapeDtypeStruct((b_pad, 1), jnp.float32),
        compiler_params=pltpu.CompilerParams(
            dimension_semantics=("parallel", "arbitrary")),
    )(uid_p, iid_p, user_emb, item_emb, w_row, b_vec)
    return out[:B]


# ---------------------------------------------------------------------------
# Public wrapper (path selection, id clamping, tiling).
# ---------------------------------------------------------------------------
def gmf_forward(user_id, item_id, user_emb, item_emb, w, b, *,
                tile_b=512, force_hbm_gather=False, max_vmem_table_rows=1024):
    """Fused GMF forward: embedding gather + multiply + linear(D->1) + sigmoid."""
    B = int(user_id.shape[0])
    num_users, D = user_emb.shape
    num_items, D2 = item_emb.shape
    assert D == D2, "user/item latent dims must match"

    # Clamp ids: an out-of-range id would otherwise become an OOB HBM DMA source.
    uid = jnp.clip(jnp.asarray(user_id, jnp.int32), 0, num_users - 1)
    iid = jnp.clip(jnp.asarray(item_id, jnp.int32), 0, num_items - 1)

    w_row = jnp.asarray(w, jnp.float32).reshape(1, D)       # Linear weight (1, D)
    b_vec = jnp.asarray(b, jnp.float32).reshape(1)          # Linear bias   (1,)

    # Tile size: multiple of 8 sublanes, no larger than the (padded) batch.
    tile_b = max(8, _round_up(tile_b, 8))
    tile_b = min(tile_b, _round_up(B, 8))

    # Small tables -> keep them resident in VMEM and gather on the MXU.
    # (One-hot size ~rows*tile_b*4B bounds the row threshold well under VMEM
    #  on all of v5e/v6e/v7x; tune max_vmem_table_rows per pltpu.get_tpu_info().)
    use_vmem_tables = (not force_hbm_gather) and \
        max(num_users, num_items) <= max_vmem_table_rows
    if use_vmem_tables:
        return _gmf_forward_vmem_tables(uid, iid, user_emb, item_emb,
                                        w_row, b_vec, tile_b, B)
    return _gmf_forward_hbm_gather(uid, iid, user_emb, item_emb,
                                   w_row, b_vec, tile_b, B)


def reference_forward(user_id, item_id, user_emb, item_emb, w, b):
    u = jnp.take(user_emb, user_id, axis=0).astype(jnp.float32)
    v = jnp.take(item_emb, item_id, axis=0).astype(jnp.float32)
    mul = u * v
    logits = jnp.sum(mul * jnp.asarray(w, jnp.float32).reshape(1, -1),
                     axis=1, keepdims=True) + jnp.asarray(b, jnp.float32).reshape(1, 1)
    return jax.nn.sigmoid(logits)


if __name__ == "__main__":
    num_users, num_items, latent_dim = 32, 64, 32
    batch = 200                      # not a tile multiple -> exercises padding

    key = jax.random.PRNGKey(0)
    k_u, k_i, k_w, k_uid, k_iid = jax.random.split(key, 5)

    # init_weight semantics: normal(std=0.01) embeddings, zero linear bias.
    user_emb = 0.01 * jax.random.normal(k_u, (num_users, latent_dim), jnp.float32)
    item_emb = 0.01 * jax.random.normal(k_i, (num_items, latent_dim), jnp.float32)
    w = jax.random.normal(k_w, (latent_dim,), jnp.float32) * (1.0 / latent_dim ** 0.5)
    b = jnp.zeros((1,), jnp.float32)

    user_id = jax.random.randint(k_uid, (batch,), 0, num_users)
    item_id = jax.random.randint(k_iid, (batch,), 0, num_items)

    ref = reference_forward(user_id, item_id, user_emb, item_emb, w, b)

    # Path 1: VMEM-resident tables, one-hot MXU gather, lane-dense output.
    out_fast = jax.block_until_ready(
        gmf_forward(user_id, item_id, user_emb, item_emb, w, b, tile_b=64))
    assert out_fast.shape == (batch, 1), out_fast.shape
    assert jnp.allclose(out_fast, ref, atol=1e-5, rtol=1e-5), \
        float(jnp.max(jnp.abs(out_fast - ref)))

    # Path 2: fused HBM row-DMA gather, double-buffered across batch tiles.
    out_dma = jax.block_until_ready(
        gmf_forward(user_id, item_id, user_emb, item_emb, w, b, tile_b=64,
                    force_hbm_gather=True))
    assert out_dma.shape == (batch, 1), out_dma.shape
    assert jnp.allclose(out_dma, ref, atol=1e-5, rtol=1e-5), \
        float(jnp.max(jnp.abs(out_dma - ref)))

    print("KERNEL_OK")
</pallas_src>

<mosaic_0001>
module attributes {stable_mosaic.version = 11 : i64} {
  func.func @gmf_vmem_kernel(%arg0: i32, %arg1: memref<1x1x64xi32, #tpu.memory_space<vmem>>, %arg2: memref<1x1x64xi32, #tpu.memory_space<vmem>>, %arg3: memref<32x32xf32, #tpu.memory_space<vmem>>, %arg4: memref<32x64xf32, #tpu.memory_space<vmem>>, %arg5: memref<1x32xf32, #tpu.memory_space<vmem>>, %arg6: memref<1xf32, #tpu.memory_space<smem>>, %arg7: memref<1x1x64xf32, #tpu.memory_space<vmem>>) attributes {dimension_semantics = [#tpu.dimension_semantics<parallel>], iteration_bounds = array<i64: 4>, scalar_prefetch = 0 : i64, scratch_operands = 0 : i64, tpu.core_type = #tpu.core_type<tc>, window_params = [{transform_indices = @transform_0, window_bounds = array<i64: 1, 1, 64>}, {transform_indices = @transform_1, window_bounds = array<i64: 1, 1, 64>}, {pipeline_mode = #tpu.pipeline_mode<synchronous>, transform_indices = @transform_2, window_bounds = array<i64: 32, 32>}, {pipeline_mode = #tpu.pipeline_mode<synchronous>, transform_indices = @transform_3, window_bounds = array<i64: 32, 64>}, {pipeline_mode = #tpu.pipeline_mode<synchronous>, transform_indices = @transform_4, window_bounds = array<i64: 1, 32>}, {transform_indices = @transform_5, window_bounds = array<i64: 1>}, {transform_indices = @transform_6, window_bounds = array<i64: 1, 1, 64>}]} {
    %c0 = arith.constant 0 : index
    %c0_0 = arith.constant 0 : index
    %c0_1 = arith.constant 0 : index
    %0 = vector.load %arg1[%c0, %c0_0, %c0_1] : memref<1x1x64xi32, #tpu.memory_space<vmem>>, vector<1x1x64xi32>
    %1 = vector.shape_cast %0 : vector<1x1x64xi32> to vector<1x64xi32>
    %c0_2 = arith.constant 0 : index
    %c0_3 = arith.constant 0 : index
    %c0_4 = arith.constant 0 : index
    %2 = vector.load %arg2[%c0_2, %c0_3, %c0_4] : memref<1x1x64xi32, #tpu.memory_space<vmem>>, vector<1x1x64xi32>
    %3 = vector.shape_cast %2 : vector<1x1x64xi32> to vector<1x64xi32>
    %4 = tpu.iota {dimensions = array<i32: 0>} : vector<32x64xi32>
    %5 = vector.broadcast %1 : vector<1x64xi32> to vector<32x64xi32>
    %6 = arith.cmpi eq, %4, %5 : vector<32x64xi32>
    %7 = arith.extui %6 : vector<32x64xi1> to vector<32x64xi32>
    %8 = arith.sitofp %7 : vector<32x64xi32> to vector<32x64xf32>
    %9 = tpu.iota {dimensions = array<i32: 0>} : vector<64x64xi32>
    %10 = vector.broadcast %3 : vector<1x64xi32> to vector<64x64xi32>
    %11 = arith.cmpi eq, %9, %10 : vector<64x64xi32>
    %12 = arith.extui %11 : vector<64x64xi1> to vector<64x64xi32>
    %13 = arith.sitofp %12 : vector<64x64xi32> to vector<64x64xf32>
    %c0_5 = arith.constant 0 : index
    %c0_6 = arith.constant 0 : index
    %14 = vector.load %arg3[%c0_5, %c0_6] : memref<32x32xf32, #tpu.memory_space<vmem>>, vector<32x32xf32>
    %cst = arith.constant dense<0.000000e+00> : vector<32x64xf32>
    %15 = tpu.matmul %14, %8, %cst {dimension_numbers = #tpu.dot_dimension_numbers<[1], [0], [0], [1], [0, 0, 1, 1], [], []>, precision = #tpu.contract_precision<fp32>} : vector<32x32xf32>, vector<32x64xf32>, vector<32x64xf32> -> vector<32x64xf32>
    %c0_7 = arith.constant 0 : index
    %c0_8 = arith.constant 0 : index
    %16 = vector.load %arg4[%c0_7, %c0_8] : memref<32x64xf32, #tpu.memory_space<vmem>>, vector<32x64xf32>
    %cst_9 = arith.constant dense<0.000000e+00> : vector<32x64xf32>
    %17 = tpu.matmul %16, %13, %cst_9 {dimension_numbers = #tpu.dot_dimension_numbers<[1], [0], [0], [1], [0, 0, 1, 1], [], []>, precision = #tpu.contract_precision<fp32>} : vector<32x64xf32>, vector<64x64xf32>, vector<32x64xf32> -> vector<32x64xf32>
    %18 = arith.mulf %15, %17 : vector<32x64xf32>
    %c0_10 = arith.constant 0 : index
    %c0_11 = arith.constant 0 : index
    %19 = vector.load %arg5[%c0_10, %c0_11] : memref<1x32xf32, #tpu.memory_space<vmem>>, vector<1x32xf32>
    %cst_12 = arith.constant dense<0.000000e+00> : vector<1x64xf32>
    %20 = tpu.matmul %19, %18, %cst_12 {dimension_numbers = #tpu.dot_dimension_numbers<[1], [0], [0], [1], [0, 0, 1, 1], [], []>, precision = #tpu.contract_precision<fp32>} : vector<1x32xf32>, vector<32x64xf32>, vector<1x64xf32> -> vector<1x64xf32>
    %c0_13 = arith.constant 0 : index
    %21 = memref.load %arg6[%c0_13] : memref<1xf32, #tpu.memory_space<smem>>
    %22 = vector.broadcast %21 : f32 to vector<1x64xf32>
    %23 = arith.addf %20, %22 : vector<1x64xf32>
    %cst_14 = arith.constant 0.000000e+00 : f32
    %24 = vector.broadcast %cst_14 : f32 to vector<1x64xf32>
    %25 = arith.subf %24, %23 : vector<1x64xf32>
    %26 = math.exp %25 : vector<1x64xf32>
    %cst_15 = arith.constant 1.000000e+00 : f32
    %27 = vector.broadcast %cst_15 : f32 to vector<1x64xf32>
    %28 = arith.addf %27, %26 : vector<1x64xf32>
    %cst_16 = arith.constant 1.000000e+00 : f32
    %29 = vector.broadcast %cst_16 : f32 to vector<1x64xf32>
    %30 = arith.divf %29, %28 : vector<1x64xf32>
    %c0_17 = arith.constant 0 : index
    %c0_18 = arith.constant 0 : index
    %c0_19 = arith.constant 0 : index
    %31 = vector.load %arg7[%c0_17, %c0_18, %c0_19] : memref<1x1x64xf32, #tpu.memory_space<vmem>>, vector<1x1x64xf32>
    %32 = vector.shape_cast %31 : vector<1x1x64xf32> to vector<1x64xf32>
    %33 = vector.shape_cast %30 : vector<1x64xf32> to vector<1x1x64xf32>
    tpu.vector_store %arg7[%c0_17, %c0_18, %c0_19], %33 {strides = array<i32>} : memref<1x1x64xf32, #tpu.memory_space<vmem>>, vector<1x1x64xf32>,
    return
  }
  func.func @transform_0(%arg0: i32) -> (i32, i32, i32) {
    %c0_i32 = arith.constant 0 : i32
    %c0_i32_0 = arith.constant 0 : i32
    %c0_i32_1 = arith.constant 0 : i32
    return %arg0, %c0_i32, %c0_i32_0 : i32, i32, i32
  }
  func.func @transform_1(%arg0: i32) -> (i32, i32, i32) {
    %c0_i32 = arith.constant 0 : i32
    %c0_i32_0 = arith.constant 0 : i32
    %c0_i32_1 = arith.constant 0 : i32
    return %arg0, %c0_i32, %c0_i32_0 : i32, i32, i32
  }
  func.func @transform_2(%arg0: i32) -> (i32, i32) {
    %c0_i32 = arith.constant 0 : i32
    %c0_i32_0 = arith.constant 0 : i32
    %c0_i32_1 = arith.constant 0 : i32
    return %c0_i32, %c0_i32_0 : i32, i32
  }
  func.func @transform_3(%arg0: i32) -> (i32, i32) {
    %c0_i32 = arith.constant 0 : i32
    %c0_i32_0 = arith.constant 0 : i32
    %c0_i32_1 = arith.constant 0 : i32
    return %c0_i32, %c0_i32_0 : i32, i32
  }
  func.func @transform_4(%arg0: i32) -> (i32, i32) {
    %c0_i32 = arith.constant 0 : i32
    %c0_i32_0 = arith.constant 0 : i32
    %c0_i32_1 = arith.constant 0 : i32
    return %c0_i32, %c0_i32_0 : i32, i32
  }
  func.func @transform_5(%arg0: i32) -> i32 {
    %c0_i32 = arith.constant 0 : i32
    %c0_i32_0 = arith.constant 0 : i32
    return %c0_i32 : i32
  }
  func.func @transform_6(%arg0: i32) -> (i32, i32, i32) {
    %c0_i32 = arith.constant 0 : i32
    %c0_i32_0 = arith.constant 0 : i32
    %c0_i32_1 = arith.constant 0 : i32
    return %arg0, %c0_i32, %c0_i32_0 : i32, i32, i32
  }
}

</mosaic_0001>

<llo_original>
// kernel: tpu_custom_call.1
$region0: #{tpu_custom_call.1}
  #allocation0 [shape = 'u32[]', space=smem, size = 0x4, offset = 0x4, fixed_abs, tag = 'smem constant byte address 0x4 - core index']
  #allocation1 [shape = 'u32[144,128]{1,0:T(1,128)}', space=vmem, size = 0x12000, scoped, tag = 'internal scratch']
  #allocation2 [shape = 'f32[1]{0:T(128)S(6)}', space=smem, size = 0x200, scoped, tag = 'scoped memory for tpu_custom_call.1']
  %s0 = inlined_call_operand.hbm [shape: s32[4,1,64], index: 0, kind: input, shape index: {}]
  %s1 = inlined_call_operand.vmem [shape: s32[4,1,64], index: 1, kind: input, shape index: {}]
  %s2 = inlined_call_operand.hbm [shape: f32[32,32], index: 2, kind: input, shape index: {}]
  %s3 = inlined_call_operand.hbm [shape: f32[32,64], index: 3, kind: input, shape index: {}]
  %s4 = inlined_call_operand.vmem [shape: f32[1,32], index: 4, kind: input, shape index: {}]
  %s5 = inlined_call_operand.<no memory space> [shape: f32[1], index: 5, kind: input, shape index: {}]
  %s6 = inlined_call_operand.hbm [shape: f32[4,1,64], index: 6, kind: output, shape index: {}]
  %s7 = sld [smem:[#allocation0]]
  $region69: #{tpu_custom_call.1} parent=0
    _
  %s9 = ssub.s32 1, %s7
  %s10 = scalar_select 0, %s9, %s7
  %11 = sst [smem:[#allocation2]] %s5
  $region1: #{tpu_custom_call.1} parent=0
    #allocation3 [shape = 'u8[1024]{0}', space=vmem, size = 0x400, scoped, tag = 'input window, operand 0']
    #allocation4 [shape = 's32[2]{0}', space=sflag, size = 0x8, scoped, tag = 'scoped memory for tpu_custom_call.1']
    #allocation5 [shape = 's32[2]{0}', space=sflag, size = 0x8, scoped, tag = 'scoped memory for tpu_custom_call.1']
    #allocation6 [shape = 'u8[16384]{0}', space=vmem, size = 0x4000, scoped, tag = 'input window, operand 2, single buffered']
    #allocation7 [shape = 's32[1]{0}', space=sflag, size = 0x4, scoped, tag = 'scoped memory for tpu_custom_call.1']
    #allocation8 [shape = 'u8[16384]{0}', space=vmem, size = 0x4000, scoped, tag = 'input window, operand 3, single buffered']
    #allocation9 [shape = 'u8[1024]{0}', space=vmem, size = 0x400, scoped, tag = 'output window, operand 0']
    %12 = vsyncpa [#allocation4], 0
    %s13 = scalar_lea.sflag [#allocation4], 1
    %14 = vsyncpa %s13, 0
    %15 = vsyncpa [#allocation7], 0
    %16 = vsyncpa [#allocation5], 0
    %s17 = scalar_lea.sflag [#allocation5], 1
    %18 = vsyncpa %s17, 0
    loop: start=0, step=1, limit=6
    $region2: #{tpu_custom_call.1} parent=1 // loop_pre_header
      _
    $region3: #{tpu_custom_call.1} parent=1 // loop_header
      %s20 = sphi 0, %s24
      %p21 = scmp.ge.s32.totalorder %s20, 6
      %s30 = sphi 0, %s32
      %s33 = sphi 0, %s30
      %s34 = sphi 0, %s33
      %s50 = sphi 0, %s34
      %s56 = sphi 0, %s58
      %s59 = sphi 0, %s56
      %s60 = sphi 0, %s59
      %s76 = sphi 0, %s60
      %s80 = sphi 0, %s80
      %s82 = sphi 0, %s80
      %s83 = sphi 0, %s82
      %s97 = sphi 0, %s83
      %s101 = sphi 0, %s101
      %s103 = sphi 0, %s101
      %s104 = sphi 0, %s103
      %s118 = sphi 0, %s104
      %s122 = sphi 0, %s122
      %s124 = sphi 0, %s122
      %s125 = sphi 0, %s124
      %s139 = sphi 0, %s125
      %s143 = sphi 0, %s143
      %s145 = sphi 0, %s143
      %s146 = sphi 0, %s145
      %s160 = sphi 0, %s146
      %s166 = sphi 0, %s168
      %s169 = sphi 0, %s166
      %s170 = sphi 0, %s169
      %s186 = sphi 0, %s170
    $region4: #{tpu_custom_call.1} parent=1 // loop_header_branch
      %23 = sbr.rel (%p21) target = $region8
    $region5: #{tpu_custom_call.1} parent=1 // loop_body
      %s25 = ssub.s32 %s20, 1
      %s26 = ssub.s32 %s20, 2
      %s27 = sadd.s32 %s20, 1
      %s28 = ssub.s32 %s20, %s27
      %p29 = scmp.eq.s32.totalorder %s28, 0
      %s31 = sadd.s32 %s30, 1
      %s32 = scalar_select %p29, %s30, %s31
      %p35 = pneg %p29
      %p36 = scmp.eq.s32.totalorder %s20, 3
      %p37 = por %p35, %p36
      %p38 = scmp.ne.s32.totalorder %s30, %s33
      %p39 = scmp.eq.s32.totalorder %s20, 0
      %p40 = por %p38, %p39
      %p41 = scmp.ne.s32.totalorder %s30, %s33
      %p42 = scmp.eq.s32.totalorder %s25, 3
      %p43 = por %p41, %p42
      %p44 = scmp.ne.s32.totalorder %s33, %s34
      %p45 = scmp.eq.s32.totalorder %s25, 0
      %p46 = por %p44, %p45
      %p47 = scmp.ne.s32.totalorder %s33, %s34
      %p48 = scmp.eq.s32.totalorder %s26, 3
      %p49 = por %p47, %p48
      %p51 = scmp.ne.s32.totalorder %s34, %s50
      %p52 = scmp.eq.s32.totalorder %s26, 0
      %p53 = por %p51, %p52
      %s54 = ssub.s32 %s20, %s27
      %p55 = scmp.eq.s32.totalorder %s54, 0
      %s57 = sadd.s32 %s56, 1
      %s58 = scalar_select %p55, %s56, %s57
      %p61 = pneg %p55
      %p62 = scmp.eq.s32.totalorder %s20, 3
      %p63 = por %p61, %p62
      %p64 = scmp.ne.s32.totalorder %s56, %s59
      %p65 = scmp.eq.s32.totalorder %s20, 0
      %p66 = por %p64, %p65
      %p67 = scmp.ne.s32.totalorder %s56, %s59
      %p68 = scmp.eq.s32.totalorder %s25, 3
      %p69 = por %p67, %p68
      %p70 = scmp.ne.s32.totalorder %s59, %s60
      %p71 = scmp.eq.s32.totalorder %s25, 0
      %p72 = por %p70, %p71
      %p73 = scmp.ne.s32.totalorder %s59, %s60
      %p74 = scmp.eq.s32.totalorder %s26, 3
      %p75 = por %p73, %p74
      %p77 = scmp.ne.s32.totalorder %s60, %s76
      %p78 = scmp.eq.s32.totalorder %s26, 0
      %p79 = por %p77, %p78
      %s81 = sadd.s32 %s80, 1
      %p84 = scmp.eq.s32.totalorder %s20, 3
      %p85 = scmp.ne.s32.totalorder %s80, %s82
      %p86 = scmp.eq.s32.totalorder %s20, 0
      %p87 = por %p85, %p86
      %p88 = scmp.ne.s32.totalorder %s80, %s82
      %p89 = scmp.eq.s32.totalorder %s25, 3
      %p90 = por %p88, %p89
      %p91 = scmp.ne.s32.totalorder %s82, %s83
      %p92 = scmp.eq.s32.totalorder %s25, 0
      %p93 = por %p91, %p92
      %p94 = scmp.ne.s32.totalorder %s82, %s83
      %p95 = scmp.eq.s32.totalorder %s26, 3
      %p96 = por %p94, %p95
      %p98 = scmp.ne.s32.totalorder %s83, %s97
      %p99 = scmp.eq.s32.totalorder %s26, 0
      %p100 = por %p98, %p99
      %s102 = sadd.s32 %s101, 1
      %p105 = scmp.eq.s32.totalorder %s20, 3
      %p106 = scmp.ne.s32.totalorder %s101, %s103
      %p107 = scmp.eq.s32.totalorder %s20, 0
      %p108 = por %p106, %p107
      %p109 = scmp.ne.s32.totalorder %s101, %s103
      %p110 = scmp.eq.s32.totalorder %s25, 3
      %p111 = por %p109, %p110
      %p112 = scmp.ne.s32.totalorder %s103, %s104
      %p113 = scmp.eq.s32.totalorder %s25, 0
      %p114 = por %p112, %p113
      %p115 = scmp.ne.s32.totalorder %s103, %s104
      %p116 = scmp.eq.s32.totalorder %s26, 3
      %p117 = por %p115, %p116
      %p119 = scmp.ne.s32.totalorder %s104, %s118
      %p120 = scmp.eq.s32.totalorder %s26, 0
      %p121 = por %p119, %p120
      %s123 = sadd.s32 %s122, 1
      %p126 = scmp.eq.s32.totalorder %s20, 3
      %p127 = scmp.ne.s32.totalorder %s122, %s124
      %p128 = scmp.eq.s32.totalorder %s20, 0
      %p129 = por %p127, %p128
      %p130 = scmp.ne.s32.totalorder %s122, %s124
      %p131 = scmp.eq.s32.totalorder %s25, 3
      %p132 = por %p130, %p131
      %p133 = scmp.ne.s32.totalorder %s124, %s125
      %p134 = scmp.eq.s32.totalorder %s25, 0
      %p135 = por %p133, %p134
      %p136 = scmp.ne.s32.totalorder %s124, %s125
      %p137 = scmp.eq.s32.totalorder %s26, 3
      %p138 = por %p136, %p137
      %p140 = scmp.ne.s32.totalorder %s125, %s139
      %p141 = scmp.eq.s32.totalorder %s26, 0
      %p142 = por %p140, %p141
      %s144 = sadd.s32 %s143, 1
      %p147 = scmp.eq.s32.totalorder %s20, 3
      %p148 = scmp.ne.s32.totalorder %s143, %s145
      %p149 = scmp.eq.s32.totalorder %s20, 0
      %p150 = por %p148, %p149
      %p151 = scmp.ne.s32.totalorder %s143, %s145
      %p152 = scmp.eq.s32.totalorder %s25, 3
      %p153 = por %p151, %p152
      %p154 = scmp.ne.s32.totalorder %s145, %s146
      %p155 = scmp.eq.s32.totalorder %s25, 0
      %p156 = por %p154, %p155
      %p157 = scmp.ne.s32.totalorder %s145, %s146
      %p158 = scmp.eq.s32.totalorder %s26, 3
      %p159 = por %p157, %p158
      %p161 = scmp.ne.s32.totalorder %s146, %s160
      %p162 = scmp.eq.s32.totalorder %s26, 0
      %p163 = por %p161, %p162
      %s164 = ssub.s32 %s20, %s27
      %p165 = scmp.eq.s32.totalorder %s164, 0
      %s167 = sadd.s32 %s166, 1
      %s168 = scalar_select %p165, %s166, %s167
      %p171 = pneg %p165
      %p172 = scmp.eq.s32.totalorder %s20, 3
      %p173 = por %p171, %p172
      %p174 = scmp.ne.s32.totalorder %s166, %s169
      %p175 = scmp.eq.s32.totalorder %s20, 0
      %p176 = por %p174, %p175
      %p177 = scmp.ne.s32.totalorder %s166, %s169
      %p178 = scmp.eq.s32.totalorder %s25, 3
      %p179 = por %p177, %p178
      %p180 = scmp.ne.s32.totalorder %s169, %s170
      %p181 = scmp.eq.s32.totalorder %s25, 0
      %p182 = por %p180, %p181
      %p183 = scmp.ne.s32.totalorder %s169, %s170
      %p184 = scmp.eq.s32.totalorder %s26, 3
      %p185 = por %p183, %p184
      %p187 = scmp.ne.s32.totalorder %s170, %s186
      %p188 = scmp.eq.s32.totalorder %s26, 0
      %p189 = por %p187, %p188
      %p190 = scmp.le.s32.totalorder 1, %s20
      %p191 = scmp.lt.s32.totalorder %s20, 5
      %p192 = pnand %p190, %p191
      %p193 = pneg %p192
      // Predicated region
      $region9: #{tpu_custom_call.1} parent=5 // pred_check
        _
      $region10: #{tpu_custom_call.1} parent=5 // pred_check_branch
        %195 = sbr.rel (%p192) target = $region12
      $region11: #{tpu_custom_call.1} parent=5 // pred_region
        %s196 = ssub.s32 %s20, 1
        // Predicated region
        $region13: #{tpu_custom_call.1} parent=11 // pred_check
          %p197 = pneg %p93
        $region14: #{tpu_custom_call.1} parent=11 // pred_check_branch
          %199 = sbr.rel (%p197) target = $region16
        $region15: #{tpu_custom_call.1} parent=11 // pred_region
          %s201 = ssub.s32 512, 512
          %202 = vsyncadd [#allocation7], %s201
          %s203 = sshll.u32 [#allocation6], 4
          %s204 = int_to_ptr.vmem [resolvable:$true] %s203
          %209 = dma.hbm_to_vmem [thread:$0]  %s2, 512, %s204, [#allocation7], 128, 128, 8
        $region16: #{tpu_custom_call.1} parent=11 // pred_fallthru
          _
        // Predicated region
        $region17: #{tpu_custom_call.1} parent=11 // pred_check
          %p210 = pneg %p114
        $region18: #{tpu_custom_call.1} parent=11 // pred_check_branch
          %212 = sbr.rel (%p210) target = $region20
        $region19: #{tpu_custom_call.1} parent=11 // pred_region
          %s214 = ssub.s32 512, 512
          %215 = vsyncadd [#allocation7], %s214
          %s216 = sshll.u32 [#allocation8], 4
          %s217 = int_to_ptr.vmem [resolvable:$true] %s216
          %222 = dma.hbm_to_vmem [thread:$0]  %s3, 512, %s217, [#allocation7], 128, 128, 8
        $region20: #{tpu_custom_call.1} parent=11 // pred_fallthru
          _
        // Predicated region
        $region21: #{tpu_custom_call.1} parent=11 // pred_check
          %p223 = pneg %p135
        $region22: #{tpu_custom_call.1} parent=11 // pred_check_branch
          %225 = sbr.rel (%p223) target = $region24
        $region23: #{tpu_custom_call.1} parent=11 // pred_region
          _
        $region24: #{tpu_custom_call.1} parent=11 // pred_fallthru
          _
        // Predicated region
        $region25: #{tpu_custom_call.1} parent=11 // pred_check
          %p226 = pneg %p156
        $region26: #{tpu_custom_call.1} parent=11 // pred_check_branch
          %228 = sbr.rel (%p226) target = $region28
        $region27: #{tpu_custom_call.1} parent=11 // pred_region
          _
        $region28: #{tpu_custom_call.1} parent=11 // pred_fallthru
          _
      $region12: #{tpu_custom_call.1} parent=5 // pred_fallthru
        _
      %p229 = scmp.lt.s32.totalorder %s20, 4
      // Predicated region
      $region29: #{tpu_custom_call.1} parent=5 // pred_check
        %p230 = pneg %p229
      $region30: #{tpu_custom_call.1} parent=5 // pred_check_branch
        %232 = sbr.rel (%p230) target = $region32
      $region31: #{tpu_custom_call.1} parent=5 // pred_region
        // Predicated region
        $region33: #{tpu_custom_call.1} parent=31 // pred_check
          %p233 = pneg %p40
        $region34: #{tpu_custom_call.1} parent=31 // pred_check_branch
          %235 = sbr.rel (%p233) target = $region36
        $region35: #{tpu_custom_call.1} parent=31 // pred_region
          %s236 = sand.u32 %s30, 1
          %s237 = scalar_lea.sflag [#allocation4], %s236
          %s238 = sand.u32 %s30, 1
          %s239 = scalar_lea.vmem [#allocation3], %s238
          %s241 = ssub.s32 16, 16
          %242 = vsyncadd %s237, %s241
          %s243 = smul.addr %s20, 16
          %s244 = scalar_lea.hbm %s0, %s243
          %s246 = sshll.u32 %s239, 4
          %s247 = int_to_ptr.vmem [resolvable:$true] %s246
          %249 = dma.hbm_to_vmem [thread:$0]  %s244, 16, %s247, %s237
        $region36: #{tpu_custom_call.1} parent=31 // pred_fallthru
          _
        // Predicated region
        $region37: #{tpu_custom_call.1} parent=31 // pred_check
          %p250 = pneg %p66
        $region38: #{tpu_custom_call.1} parent=31 // pred_check_branch
          %252 = sbr.rel (%p250) target = $region40
        $region39: #{tpu_custom_call.1} parent=31 // pred_region
          %p253 = scmp.lt.s32.totalorder %s20, 3
          %s254 = scalar_select %p253, %s20, 3
          %s255 = scalar_lea.vmem %s1, %s254
        $region40: #{tpu_custom_call.1} parent=31 // pred_fallthru
          _
      $region32: #{tpu_custom_call.1} parent=5 // pred_fallthru
        _
      %p256 = scmp.le.s32.totalorder 1, %s20
      %p257 = scmp.lt.s32.totalorder %s20, 5
      %p258 = pnand %p256, %p257
      %p259 = pneg %p258
      // Predicated region
      $region41: #{tpu_custom_call.1} parent=5 // pred_check
        _
      $region42: #{tpu_custom_call.1} parent=5 // pred_check_branch
        %261 = sbr.rel (%p258) target = $region44
      $region43: #{tpu_custom_call.1} parent=5 // pred_region
        %s262 = ssub.s32 %s20, 1
        %s263 = sand.u32 %s33, 1
        %s264 = scalar_lea.sflag [#allocation4], %s263
        %s265 = sand.u32 %s33, 1
        %s266 = scalar_lea.vmem [#allocation3], %s265
        // Predicated region
        $region45: #{tpu_custom_call.1} parent=43 // pred_check
          %p267 = pneg %p46
        $region46: #{tpu_custom_call.1} parent=43 // pred_check_branch
          %269 = sbr.rel (%p267) target = $region48
        $region47: #{tpu_custom_call.1} parent=43 // pred_region
          %270 = dma.done %s264, 16
        $region48: #{tpu_custom_call.1} parent=43 // pred_fallthru
          _
        // Predicated region
        $region49: #{tpu_custom_call.1} parent=43 // pred_check
          %p271 = pneg %p93
        $region50: #{tpu_custom_call.1} parent=43 // pred_check_branch
          %273 = sbr.rel (%p271) target = $region52
        $region51: #{tpu_custom_call.1} parent=43 // pred_region
          %274 = dma.done [#allocation7], 512
        $region52: #{tpu_custom_call.1} parent=43 // pred_fallthru
          _
        // Predicated region
        $region53: #{tpu_custom_call.1} parent=43 // pred_check
          %p275 = pneg %p114
        $region54: #{tpu_custom_call.1} parent=43 // pred_check_branch
          %277 = sbr.rel (%p275) target = $region56
        $region55: #{tpu_custom_call.1} parent=43 // pred_region
          %278 = dma.done [#allocation7], 512
        $region56: #{tpu_custom_call.1} parent=43 // pred_fallthru
          _
        %s279 = sand.u32 %s33, 1
        %s280 = scalar_lea.sflag [#allocation4], %s279
        %s281 = sand.u32 %s33, 1
        %s282 = scalar_lea.vmem [#allocation3], %s281
        %p283 = pneg %p46
        %p284 = pneg %p43
        %p285 = scmp.lt.s32.totalorder %s25, 3
        %s286 = scalar_select %p285, %s25, 3
        %s287 = scalar_lea.vmem %s1, %s286
        %p288 = pneg %p72
        %p289 = pneg %p69
        %p290 = pneg %p93
        %p291 = pneg %p90
        %p292 = pneg %p114
        %p293 = pneg %p111
        %p294 = pneg %p135
        %p295 = pneg %p132
        %p296 = pneg %p156
        %p297 = pneg %p153
        %p298 = pneg %p182
        %p299 = pneg %p179
        %s300 = sand.u32 %s169, 1
        %s301 = scalar_lea.sflag [#allocation5], %s300
        %s302 = sand.u32 %s169, 1
        %s303 = scalar_lea.vmem [#allocation9], %s302
        %p304 = scmp.lt.s32.totalorder %s25, 3
        %s305 = scalar_select %p304, %s25, 3
        %s306 = scalar_lea.vmem %s1, %s305
        %v307 = vld [vmem:[%s266] sm:$0x1]
        %v308 = vld [vmem:[%s306] sm:$0x1]
        %v309 = vlaneseq
        %v310 = vshrl.u32 %v309, 7
        %v311 = vadd.s32 %v310, 8
        %v312 = vadd.s32 %v310, 16
        %v313 = vadd.s32 %v310, 24
        %v314 = vlaneseq
        %v315 = vshrl.u32 %v314, 7
        %v316 = vsub.s32 0, %v315
        %v317 = vrot.slane %v307, %v316
        %vm318 = vcmp.eq.s32.totalorder %v310, %v317
        %vm319 = vcmp.eq.s32.totalorder %v311, %v317
        %vm320 = vcmp.eq.s32.totalorder %v312, %v317
        %vm321 = vcmp.eq.s32.totalorder %v313, %v317
        %v322 = vsel %vm318, 1, 0
        %v323 = vsel %vm319, 1, 0
        %v324 = vsel %vm320, 1, 0
        %v325 = vsel %vm321, 1, 0
        %v326 = vcvt.s32.f32 %v322
        %v327 = vcvt.s32.f32 %v323
        %v328 = vcvt.s32.f32 %v324
        %v329 = vcvt.s32.f32 %v325
        %v330 = vadd.s32 %v310, 32
        %v331 = vadd.s32 %v310, 40
        %v332 = vadd.s32 %v310, 48
        %v333 = vadd.s32 %v310, 56
        %v334 = vlaneseq
        %v335 = vshrl.u32 %v334, 7
        %v336 = vsub.s32 0, %v335
        %v337 = vrot.slane %v308, %v336
        %vm338 = vcmp.eq.s32.totalorder %v310, %v337
        %vm339 = vcmp.eq.s32.totalorder %v311, %v337
        %vm340 = vcmp.eq.s32.totalorder %v312, %v337
        %vm341 = vcmp.eq.s32.totalorder %v313, %v337
        %vm342 = vcmp.eq.s32.totalorder %v330, %v337
        %vm343 = vcmp.eq.s32.totalorder %v331, %v337
        %vm344 = vcmp.eq.s32.totalorder %v332, %v337
        %vm345 = vcmp.eq.s32.totalorder %v333, %v337
        %v346 = vsel %vm338, 1, 0
        %v347 = vsel %vm339, 1, 0
        %v348 = vsel %vm340, 1, 0
        %v349 = vsel %vm341, 1, 0
        %v350 = vsel %vm342, 1, 0
        %v351 = vsel %vm343, 1, 0
        %v352 = vsel %vm344, 1, 0
        %v353 = vsel %vm345, 1, 0
        %v354 = vcvt.s32.f32 %v346
        %v355 = vcvt.s32.f32 %v347
        %v356 = vcvt.s32.f32 %v348
        %v357 = vcvt.s32.f32 %v349
        %v358 = vcvt.s32.f32 %v350
        %v359 = vcvt.s32.f32 %v351
        %v360 = vcvt.s32.f32 %v352
        %v361 = vcvt.s32.f32 %v353
        %v362 = vld [vmem:[#allocation6] sm:$0xff]
        %v363 = vld [vmem:[#allocation6 + $0x8] sm:$0xff]
        %v364 = vld [vmem:[#allocation6 + $0x10] sm:$0xff]
        %v365 = vld [vmem:[#allocation6 + $0x18] sm:$0xff]
        %vm366 = vcmask 261120
        %v368 = vsel %vm366, %v362, 0
        %v371 = vsel %vm366, %v363, 0
        %v374 = vsel %vm366, %v364, 0
        %v377 = vsel %vm366, %v365, 0
        %379 = vmatprep.subr.mxu0 0.0
        %v380 = vand.u32 %v326, 4294901760
        %381 = vmatpush1.msra.mxu0 %v380
        %382 = vmatprep.subr.mxu0 0.0
        %v383 = vand.u32 %v327, 4294901760
        %384 = vmatpush1.msra.mxu0 %v383
        %385 = vmatprep.subr.mxu0 0.0
        %v386 = vand.u32 %v328, 4294901760
        %387 = vmatpush1.msra.mxu0 %v386
        %388 = vmatprep.subr.mxu0 0.0
        %v389 = vand.u32 %v329, 4294901760
        %390 = vmatpush1.msra.mxu0 %v389
        %391 = vmatprep.subr.mxu0 0.0
        %392 = vmatpush1.msra.mxu0 0.0
        %393 = vmatprep.subr.mxu0 0.0
        %394 = vmatpush1.msra.mxu0 0.0
        %395 = vmatprep.subr.mxu0 0.0
        %396 = vmatpush1.msra.mxu0 0.0
        %397 = vmatprep.subr.mxu0 0.0
        %398 = vmatpush1.msra.mxu0 0.0
        %399 = vmatprep.subr.mxu0 0.0
        %400 = vmatpush1.msra.mxu0 0.0
        %401 = vmatprep.subr.mxu0 0.0
        %402 = vmatpush1.msra.mxu0 0.0
        %403 = vmatprep.subr.mxu0 0.0
        %404 = vmatpush1.msra.mxu0 0.0
        %405 = vmatprep.subr.mxu0 0.0
        %406 = vmatpush1.msra.mxu0 0.0
        %407 = vmatprep.subr.mxu0 0.0
        %408 = vmatpush1.msra.mxu0 0.0
        %409 = vmatprep.subr.mxu0 0.0
        %410 = vmatpush1.msra.mxu0 0.0
        %411 = vmatprep.subr.mxu0 0.0
        %412 = vmatpush1.msra.mxu0 0.0
        %413 = vmatprep.subr.mxu0 0.0
        %414 = vmatpush1.msra.mxu0 0.0
        %415 = vmatprep.subr.mxu0 0.0
        %416 = vmatpush1.msra.mxu0 0.0
        %417 = vmatprep.subr.mxu0 0.0
        %418 = vmatpush1.msra.mxu0 0.0
        %419 = vmatprep.subr.mxu0 0.0
        %420 = vmatpush1.msra.mxu0 0.0
        %421 = vmatprep.subr.mxu0 0.0
        %422 = vmatpush1.msra.mxu0 0.0
        %423 = vmatprep.subr.mxu0 0.0
        %424 = vmatpush1.msra.mxu0 0.0
        %425 = vmatprep.subr.mxu0 0.0
        %426 = vmatpush1.msra.mxu0 0.0
        %427 = vmatprep.subr.mxu0 0.0
        %428 = vmatpush1.msra.mxu0 0.0
        %429 = vmatprep.subr.mxu0 0.0
        %430 = vmatpush1.msra.mxu0 0.0
        %431 = vmatprep.subr.mxu0 0.0
        %432 = vmatpush1.msra.mxu0 0.0
        %433 = vmatprep.subr.mxu0 0.0
        %434 = vmatpush1.msra.mxu0 0.0
        %435 = vmatprep.subr.mxu0 0.0
        %436 = vmatpush1.msra.mxu0 0.0
        %437 = vmatprep.subr.mxu0 0.0
        %438 = vmatpush1.msra.mxu0 0.0
        %439 = vmatprep.subr.mxu0 0.0
        %440 = vmatpush1.msra.mxu0 0.0
        %441 = vmatprep.subr.mxu0 0.0
        %442 = vmatpush1.msra.mxu0 0.0
        %443 = vmatprep.subr.mxu0 0.0
        %444 = vmatpush1.msra.mxu0 0.0
        %445 = vmatprep.subr.mxu0 0.0
        %446 = vmatpush1.msra.mxu0 0.0
        %447 = vmatprep.mubr.f32.mxu0 0.0
        %v448 = vand.u32 %v368, 4294901760
        %v449 = vsub.f32 %v368, %v448
        %v450 = vand.u32 %v449, 4294901760
        %v451 = vsub.f32 %v449, %v450
        %v452 = vand.u32 %v451, 4294901760
        %453 = vmatmul.mubr.f32.gmra.mrb[0].mxu0 %v452
        %v454 = vpop.f32.mrb[0].mxu0
        %v455 = vadd.f32 0.0, %v454
        %v456 = vpop.f32.mrb[0].mxu0
        %457 = vmatprep.mubr.f32.mxu0 0.0
        %v458 = vand.u32 %v371, 4294901760
        %v459 = vsub.f32 %v371, %v458
        %v460 = vand.u32 %v459, 4294901760
        %v461 = vsub.f32 %v459, %v460
        %v462 = vand.u32 %v461, 4294901760
        %463 = vmatmul.mubr.f32.gmra.mrb[0].mxu0 %v462
        %v464 = vpop.f32.mrb[0].mxu0
        %v465 = vadd.f32 0.0, %v464
        %v466 = vpop.f32.mrb[0].mxu0
        %467 = vmatprep.mubr.f32.mxu0 0.0
        %v468 = vand.u32 %v374, 4294901760
        %v469 = vsub.f32 %v374, %v468
        %v470 = vand.u32 %v469, 4294901760
        %v471 = vsub.f32 %v469, %v470
        %v472 = vand.u32 %v471, 4294901760
        %473 = vmatmul.mubr.f32.gmra.mrb[0].mxu0 %v472
        %v474 = vpop.f32.mrb[0].mxu0
        %v475 = vadd.f32 0.0, %v474
        %v476 = vpop.f32.mrb[0].mxu0
        %477 = vmatprep.mubr.f32.mxu0 0.0
        %v478 = vand.u32 %v377, 4294901760
        %v479 = vsub.f32 %v377, %v478
        %v480 = vand.u32 %v479, 4294901760
        %v481 = vsub.f32 %v479, %v480
        %v482 = vand.u32 %v481, 4294901760
        %483 = vmatmul.mubr.f32.gmra.mrb[0].mxu0 %v482
        %v484 = vpop.f32.mrb[0].mxu0
        %v485 = vadd.f32 0.0, %v484
        %v486 = vpop.f32.mrb[0].mxu0
        %487 = vdwg.mxu0
        %488 = vmatprep.subr.mxu0 0.0
        %v489 = vand.u32 %v326, 4294901760
        %v490 = vsub.f32 %v326, %v489
        %v491 = vand.u32 %v490, 4294901760
        %v492 = vsub.f32 %v490, %v491
        %v493 = vand.u32 %v492, 4294901760
        %494 = vmatpush1.msra.mxu0 %v493
        %495 = vmatprep.subr.mxu0 0.0
        %v496 = vand.u32 %v327, 4294901760
        %v497 = vsub.f32 %v327, %v496
        %v498 = vand.u32 %v497, 4294901760
        %v499 = vsub.f32 %v497, %v498
        %v500 = vand.u32 %v499, 4294901760
        %501 = vmatpush1.msra.mxu0 %v500
        %502 = vmatprep.subr.mxu0 0.0
        %v503 = vand.u32 %v328, 4294901760
        %v504 = vsub.f32 %v328, %v503
        %v505 = vand.u32 %v504, 4294901760
        %v506 = vsub.f32 %v504, %v505
        %v507 = vand.u32 %v506, 4294901760
        %508 = vmatpush1.msra.mxu0 %v507
        %509 = vmatprep.subr.mxu0 0.0
        %v510 = vand.u32 %v329, 4294901760
        %v511 = vsub.f32 %v329, %v510
        %v512 = vand.u32 %v511, 4294901760
        %v513 = vsub.f32 %v511, %v512
        %v514 = vand.u32 %v513, 4294901760
        %515 = vmatpush1.msra.mxu0 %v514
        %516 = vmatprep.subr.mxu0 0.0
        %517 = vmatpush1.msra.mxu0 0.0
        %518 = vmatprep.subr.mxu0 0.0
        %519 = vmatpush1.msra.mxu0 0.0
        %520 = vmatprep.subr.mxu0 0.0
        %521 = vmatpush1.msra.mxu0 0.0
        %522 = vmatprep.subr.mxu0 0.0
        %523 = vmatpush1.msra.mxu0 0.0
        %524 = vmatprep.subr.mxu0 0.0
        %525 = vmatpush1.msra.mxu0 0.0
        %526 = vmatprep.subr.mxu0 0.0
        %527 = vmatpush1.msra.mxu0 0.0
        %528 = vmatprep.subr.mxu0 0.0
        %529 = vmatpush1.msra.mxu0 0.0
        %530 = vmatprep.subr.mxu0 0.0
        %531 = vmatpush1.msra.mxu0 0.0
        %532 = vmatprep.subr.mxu0 0.0
        %533 = vmatpush1.msra.mxu0 0.0
        %534 = vmatprep.subr.mxu0 0.0
        %535 = vmatpush1.msra.mxu0 0.0
        %536 = vmatprep.subr.mxu0 0.0
        %537 = vmatpush1.msra.mxu0 0.0
        %538 = vmatprep.subr.mxu0 0.0
        %539 = vmatpush1.msra.mxu0 0.0
        %540 = vmatprep.subr.mxu0 0.0
        %541 = vmatpush1.msra.mxu0 0.0
        %542 = vmatprep.subr.mxu0 0.0
        %543 = vmatpush1.msra.mxu0 0.0
        %544 = vmatprep.subr.mxu0 0.0
        %545 = vmatpush1.msra.mxu0 0.0
        %546 = vmatprep.subr.mxu0 0.0
        %547 = vmatpush1.msra.mxu0 0.0
        %548 = vmatprep.subr.mxu0 0.0
        %549 = vmatpush1.msra.mxu0 0.0
        %550 = vmatprep.subr.mxu0 0.0
        %551 = vmatpush1.msra.mxu0 0.0
        %552 = vmatprep.subr.mxu0 0.0
        %553 = vmatpush1.msra.mxu0 0.0
        %554 = vmatprep.subr.mxu0 0.0
        %555 = vmatpush1.msra.mxu0 0.0
        %556 = vmatprep.subr.mxu0 0.0
        %557 = vmatpush1.msra.mxu0 0.0
        %558 = vmatprep.subr.mxu0 0.0
        %559 = vmatpush1.msra.mxu0 0.0
        %560 = vmatprep.subr.mxu0 0.0
        %561 = vmatpush1.msra.mxu0 0.0
        %562 = vmatprep.subr.mxu0 0.0
        %563 = vmatpush1.msra.mxu0 0.0
        %564 = vmatprep.subr.mxu0 0.0
        %565 = vmatpush1.msra.mxu0 0.0
        %566 = vmatprep.subr.mxu0 0.0
        %567 = vmatpush1.msra.mxu0 0.0
        %568 = vmatprep.subr.mxu0 0.0
        %569 = vmatpush1.msra.mxu0 0.0
        %570 = vmatprep.subr.mxu0 0.0
        %571 = vmatpush1.msra.mxu0 0.0
        %572 = vmatprep.mubr.f32.mxu0 0.0
        %v573 = vand.u32 %v368, 4294901760
        %574 = vmatmul.mubr.f32.gmra.mrb[0].mxu0 %v573
        %v575 = vpop.f32.mrb[0].mxu0
        %v576 = vadd.f32 %v455, %v575
        %v577 = vpop.f32.mrb[0].mxu0
        %578 = vmatprep.mubr.f32.mxu0 0.0
        %v579 = vand.u32 %v371, 4294901760
        %580 = vmatmul.mubr.f32.gmra.mrb[0].mxu0 %v579
        %v581 = vpop.f32.mrb[0].mxu0
        %v582 = vadd.f32 %v465, %v581
        %v583 = vpop.f32.mrb[0].mxu0
        %584 = vmatprep.mubr.f32.mxu0 0.0
        %v585 = vand.u32 %v374, 4294901760
        %586 = vmatmul.mubr.f32.gmra.mrb[0].mxu0 %v585
        %v587 = vpop.f32.mrb[0].mxu0
        %v588 = vadd.f32 %v475, %v587
        %v589 = vpop.f32.mrb[0].mxu0
        %590 = vmatprep.mubr.f32.mxu0 0.0
        %v591 = vand.u32 %v377, 4294901760
        %592 = vmatmul.mubr.f32.gmra.mrb[0].mxu0 %v591
        %v593 = vpop.f32.mrb[0].mxu0
        %v594 = vadd.f32 %v485, %v593
        %v595 = vpop.f32.mrb[0].mxu0
        %596 = vdwg.mxu0
        %597 = vmatprep.subr.mxu0 0.0
        %v598 = vand.u32 %v326, 4294901760
        %v599 = vsub.f32 %v326, %v598
        %600 = vmatpush1.msra.mxu0 %v599
        %601 = vmatprep.subr.mxu0 0.0
        %v602 = vand.u32 %v327, 4294901760
        %v603 = vsub.f32 %v327, %v602
        %604 = vmatpush1.msra.mxu0 %v603
        %605 = vmatprep.subr.mxu0 0.0
        %v606 = vand.u32 %v328, 4294901760
        %v607 = vsub.f32 %v328, %v606
        %608 = vmatpush1.msra.mxu0 %v607
        %609 = vmatprep.subr.mxu0 0.0
        %v610 = vand.u32 %v329, 4294901760
        %v611 = vsub.f32 %v329, %v610
        %612 = vmatpush1.msra.mxu0 %v611
        %613 = vmatprep.subr.mxu0 0.0
        %614 = vmatpush1.msra.mxu0 0.0
        %615 = vmatprep.subr.mxu0 0.0
        %616 = vmatpush1.msra.mxu0 0.0
        %617 = vmatprep.subr.mxu0 0.0
        %618 = vmatpush1.msra.mxu0 0.0
        %619 = vmatprep.subr.mxu0 0.0
        %620 = vmatpush1.msra.mxu0 0.0
        %621 = vmatprep.subr.mxu0 0.0
        %622 = vmatpush1.msra.mxu0 0.0
        %623 = vmatprep.subr.mxu0 0.0
        %624 = vmatpush1.msra.mxu0 0.0
        %625 = vmatprep.subr.mxu0 0.0
        %626 = vmatpush1.msra.mxu0 0.0
        %627 = vmatprep.subr.mxu0 0.0
        %628 = vmatpush1.msra.mxu0 0.0
        %629 = vmatprep.subr.mxu0 0.0
        %630 = vmatpush1.msra.mxu0 0.0
        %631 = vmatprep.subr.mxu0 0.0
        %632 = vmatpush1.msra.mxu0 0.0
        %633 = vmatprep.subr.mxu0 0.0
        %634 = vmatpush1.msra.mxu0 0.0
        %635 = vmatprep.subr.mxu0 0.0
        %636 = vmatpush1.msra.mxu0 0.0
        %637 = vmatprep.subr.mxu0 0.0
        %638 = vmatpush1.msra.mxu0 0.0
        %639 = vmatprep.subr.mxu0 0.0
        %640 = vmatpush1.msra.mxu0 0.0
        %641 = vmatprep.subr.mxu0 0.0
        %642 = vmatpush1.msra.mxu0 0.0
        %643 = vmatprep.subr.mxu0 0.0
        %644 = vmatpush1.msra.mxu0 0.0
        %645 = vmatprep.subr.mxu0 0.0
        %646 = vmatpush1.msra.mxu0 0.0
        %647 = vmatprep.subr.mxu0 0.0
        %648 = vmatpush1.msra.mxu0 0.0
        %649 = vmatprep.subr.mxu0 0.0
        %650 = vmatpush1.msra.mxu0 0.0
        %651 = vmatprep.subr.mxu0 0.0
        %652 = vmatpush1.msra.mxu0 0.0
        %653 = vmatprep.subr.mxu0 0.0
        %654 = vmatpush1.msra.mxu0 0.0
        %655 = vmatprep.subr.mxu0 0.0
        %656 = vmatpush1.msra.mxu0 0.0
        %657 = vmatprep.subr.mxu0 0.0
        %658 = vmatpush1.msra.mxu0 0.0
        %659 = vmatprep.subr.mxu0 0.0
        %660 = vmatpush1.msra.mxu0 0.0
        %661 = vmatprep.subr.mxu0 0.0
        %662 = vmatpush1.msra.mxu0 0.0
        %663 = vmatprep.subr.mxu0 0.0
        %664 = vmatpush1.msra.mxu0 0.0
        %665 = vmatprep.subr.mxu0 0.0
        %666 = vmatpush1.msra.mxu0 0.0
        %667 = vmatprep.subr.mxu0 0.0
        %668 = vmatpush1.msra.mxu0 0.0
        %669 = vmatprep.mubr.f32.mxu0 0.0
        %v670 = vand.u32 %v368, 4294901760
        %v671 = vsub.f32 %v368, %v670
        %672 = vmatmul.mubr.f32.gmra.mrb[0].mxu0 %v671
        %v673 = vpop.f32.mrb[0].mxu0
        %v674 = vadd.f32 %v576, %v673
        %v675 = vpop.f32.mrb[0].mxu0
        %676 = vmatprep.mubr.f32.mxu0 0.0
        %v677 = vand.u32 %v371, 4294901760
        %v678 = vsub.f32 %v371, %v677
        %679 = vmatmul.mubr.f32.gmra.mrb[0].mxu0 %v678
        %v680 = vpop.f32.mrb[0].mxu0
        %v681 = vadd.f32 %v582, %v680
        %v682 = vpop.f32.mrb[0].mxu0
        %683 = vmatprep.mubr.f32.mxu0 0.0
        %v684 = vand.u32 %v374, 4294901760
        %v685 = vsub.f32 %v374, %v684
        %686 = vmatmul.mubr.f32.gmra.mrb[0].mxu0 %v685
        %v687 = vpop.f32.mrb[0].mxu0
        %v688 = vadd.f32 %v588, %v687
        %v689 = vpop.f32.mrb[0].mxu0
        %690 = vmatprep.mubr.f32.mxu0 0.0
        %v691 = vand.u32 %v377, 4294901760
        %v692 = vsub.f32 %v377, %v691
        %693 = vmatmul.mubr.f32.gmra.mrb[0].mxu0 %v692
        %v694 = vpop.f32.mrb[0].mxu0
        %v695 = vadd.f32 %v594, %v694
        %v696 = vpop.f32.mrb[0].mxu0
        %697 = vdwg.mxu0
        %698 = vmatprep.subr.mxu0 0.0
        %v699 = vand.u32 %v326, 4294901760
        %700 = vmatpush1.msra.mxu0 %v699
        %701 = vmatprep.subr.mxu0 0.0
        %v702 = vand.u32 %v327, 4294901760
        %703 = vmatpush1.msra.mxu0 %v702
        %704 = vmatprep.subr.mxu0 0.0
        %v705 = vand.u32 %v328, 4294901760
        %706 = vmatpush1.msra.mxu0 %v705
        %707 = vmatprep.subr.mxu0 0.0
        %v708 = vand.u32 %v329, 4294901760
        %709 = vmatpush1.msra.mxu0 %v708
        %710 = vmatprep.subr.mxu0 0.0
        %711 = vmatpush1.msra.mxu0 0.0
        %712 = vmatprep.subr.mxu0 0.0
        %713 = vmatpush1.msra.mxu0 0.0
        %714 = vmatprep.subr.mxu0 0.0
        %715 = vmatpush1.msra.mxu0 0.0
        %716 = vmatprep.subr.mxu0 0.0
        %717 = vmatpush1.msra.mxu0 0.0
        %718 = vmatprep.subr.mxu0 0.0
        %719 = vmatpush1.msra.mxu0 0.0
        %720 = vmatprep.subr.mxu0 0.0
        %721 = vmatpush1.msra.mxu0 0.0
        %722 = vmatprep.subr.mxu0 0.0
        %723 = vmatpush1.msra.mxu0 0.0
        %724 = vmatprep.subr.mxu0 0.0
        %725 = vmatpush1.msra.mxu0 0.0
        %726 = vmatprep.subr.mxu0 0.0
        %727 = vmatpush1.msra.mxu0 0.0
        %728 = vmatprep.subr.mxu0 0.0
        %729 = vmatpush1.msra.mxu0 0.0
        %730 = vmatprep.subr.mxu0 0.0
        %731 = vmatpush1.msra.mxu0 0.0
        %732 = vmatprep.subr.mxu0 0.0
        %733 = vmatpush1.msra.mxu0 0.0
        %734 = vmatprep.subr.mxu0 0.0
        %735 = vmatpush1.msra.mxu0 0.0
        %736 = vmatprep.subr.mxu0 0.0
        %737 = vmatpush1.msra.mxu0 0.0
        %738 = vmatprep.subr.mxu0 0.0
        %739 = vmatpush1.msra.mxu0 0.0
        %740 = vmatprep.subr.mxu0 0.0
        %741 = vmatpush1.msra.mxu0 0.0
        %742 = vmatprep.subr.mxu0 0.0
        %743 = vmatpush1.msra.mxu0 0.0
        %744 = vmatprep.subr.mxu0 0.0
        %745 = vmatpush1.msra.mxu0 0.0
        %746 = vmatprep.subr.mxu0 0.0
        %747 = vmatpush1.msra.mxu0 0.0
        %748 = vmatprep.subr.mxu0 0.0
        %749 = vmatpush1.msra.mxu0 0.0
        %750 = vmatprep.subr.mxu0 0.0
        %751 = vmatpush1.msra.mxu0 0.0
        %752 = vmatprep.subr.mxu0 0.0
        %753 = vmatpush1.msra.mxu0 0.0
        %754 = vmatprep.subr.mxu0 0.0
        %755 = vmatpush1.msra.mxu0 0.0
        %756 = vmatprep.subr.mxu0 0.0
        %757 = vmatpush1.msra.mxu0 0.0
        %758 = vmatprep.subr.mxu0 0.0
        %759 = vmatpush1.msra.mxu0 0.0
        %760 = vmatprep.subr.mxu0 0.0
        %761 = vmatpush1.msra.mxu0 0.0
        %762 = vmatprep.subr.mxu0 0.0
        %763 = vmatpush1.msra.mxu0 0.0
        %764 = vmatprep.subr.mxu0 0.0
        %765 = vmatpush1.msra.mxu0 0.0
        %766 = vmatprep.mubr.f32.mxu0 0.0
        %v767 = vand.u32 %v368, 4294901760
        %v768 = vsub.f32 %v368, %v767
        %v769 = vand.u32 %v768, 4294901760
        %770 = vmatmul.mubr.f32.gmra.mrb[0].mxu0 %v769
        %v771 = vpop.f32.mrb[0].mxu0
        %v772 = vadd.f32 %v674, %v771
        %v773 = vpop.f32.mrb[0].mxu0
        %774 = vmatprep.mubr.f32.mxu0 0.0
        %v775 = vand.u32 %v371, 4294901760
        %v776 = vsub.f32 %v371, %v775
        %v777 = vand.u32 %v776, 4294901760
        %778 = vmatmul.mubr.f32.gmra.mrb[0].mxu0 %v777
        %v779 = vpop.f32.mrb[0].mxu0
        %v780 = vadd.f32 %v681, %v779
        %v781 = vpop.f32.mrb[0].mxu0
        %782 = vmatprep.mubr.f32.mxu0 0.0
        %v783 = vand.u32 %v374, 4294901760
        %v784 = vsub.f32 %v374, %v783
        %v785 = vand.u32 %v784, 4294901760
        %786 = vmatmul.mubr.f32.gmra.mrb[0].mxu0 %v785
        %v787 = vpop.f32.mrb[0].mxu0
        %v788 = vadd.f32 %v688, %v787
        %v789 = vpop.f32.mrb[0].mxu0
        %790 = vmatprep.mubr.f32.mxu0 0.0
        %v791 = vand.u32 %v377, 4294901760
        %v792 = vsub.f32 %v377, %v791
        %v793 = vand.u32 %v792, 4294901760
        %794 = vmatmul.mubr.f32.gmra.mrb[0].mxu0 %v793
        %v795 = vpop.f32.mrb[0].mxu0
        %v796 = vadd.f32 %v695, %v795
        %v797 = vpop.f32.mrb[0].mxu0
        %798 = vdwg.mxu0
        %799 = vmatprep.subr.mxu0 0.0
        %v800 = vand.u32 %v326, 4294901760
        %v801 = vsub.f32 %v326, %v800
        %v802 = vand.u32 %v801, 4294901760
        %803 = vmatpush1.msra.mxu0 %v802
        %804 = vmatprep.subr.mxu0 0.0
        %v805 = vand.u32 %v327, 4294901760
        %v806 = vsub.f32 %v327, %v805
        %v807 = vand.u32 %v806, 4294901760
        %808 = vmatpush1.msra.mxu0 %v807
        %809 = vmatprep.subr.mxu0 0.0
        %v810 = vand.u32 %v328, 4294901760
        %v811 = vsub.f32 %v328, %v810
        %v812 = vand.u32 %v811, 4294901760
        %813 = vmatpush1.msra.mxu0 %v812
        %814 = vmatprep.subr.mxu0 0.0
        %v815 = vand.u32 %v329, 4294901760
        %v816 = vsub.f32 %v329, %v815
        %v817 = vand.u32 %v816, 4294901760
        %818 = vmatpush1.msra.mxu0 %v817
        %819 = vmatprep.subr.mxu0 0.0
        %820 = vmatpush1.msra.mxu0 0.0
        %821 = vmatprep.subr.mxu0 0.0
        %822 = vmatpush1.msra.mxu0 0.0
        %823 = vmatprep.subr.mxu0 0.0
        %824 = vmatpush1.msra.mxu0 0.0
        %825 = vmatprep.subr.mxu0 0.0
        %826 = vmatpush1.msra.mxu0 0.0
        %827 = vmatprep.subr.mxu0 0.0
        %828 = vmatpush1.msra.mxu0 0.0
        %829 = vmatprep.subr.mxu0 0.0
        %830 = vmatpush1.msra.mxu0 0.0
        %831 = vmatprep.subr.mxu0 0.0
        %832 = vmatpush1.msra.mxu0 0.0
        %833 = vmatprep.subr.mxu0 0.0
        %834 = vmatpush1.msra.mxu0 0.0
        %835 = vmatprep.subr.mxu0 0.0
        %836 = vmatpush1.msra.mxu0 0.0
        %837 = vmatprep.subr.mxu0 0.0
        %838 = vmatpush1.msra.mxu0 0.0
        %839 = vmatprep.subr.mxu0 0.0
        %840 = vmatpush1.msra.mxu0 0.0
        %841 = vmatprep.subr.mxu0 0.0
        %842 = vmatpush1.msra.mxu0 0.0
        %843 = vmatprep.subr.mxu0 0.0
        %844 = vmatpush1.msra.mxu0 0.0
        %845 = vmatprep.subr.mxu0 0.0
        %846 = vmatpush1.msra.mxu0 0.0
        %847 = vmatprep.subr.mxu0 0.0
        %848 = vmatpush1.msra.mxu0 0.0
        %849 = vmatprep.subr.mxu0 0.0
        %850 = vmatpush1.msra.mxu0 0.0
        %851 = vmatprep.subr.mxu0 0.0
        %852 = vmatpush1.msra.mxu0 0.0
        %853 = vmatprep.subr.mxu0 0.0
        %854 = vmatpush1.msra.mxu0 0.0
        %855 = vmatprep.subr.mxu0 0.0
        %856 = vmatpush1.msra.mxu0 0.0
        %857 = vmatprep.subr.mxu0 0.0
        %858 = vmatpush1.msra.mxu0 0.0
        %859 = vmatprep.subr.mxu0 0.0
        %860 = vmatpush1.msra.mxu0 0.0
        %861 = vmatprep.subr.mxu0 0.0
        %862 = vmatpush1.msra.mxu0 0.0
        %863 = vmatprep.subr.mxu0 0.0
        %864 = vmatpush1.msra.mxu0 0.0
        %865 = vmatprep.subr.mxu0 0.0
        %866 = vmatpush1.msra.mxu0 0.0
        %867 = vmatprep.subr.mxu0 0.0
        %868 = vmatpush1.msra.mxu0 0.0
        %869 = vmatprep.subr.mxu0 0.0
        %870 = vmatpush1.msra.mxu0 0.0
        %871 = vmatprep.subr.mxu0 0.0
        %872 = vmatpush1.msra.mxu0 0.0
        %873 = vmatprep.subr.mxu0 0.0
        %874 = vmatpush1.msra.mxu0 0.0
        %875 = vmatprep.mubr.f32.mxu0 0.0
        %v876 = vand.u32 %v368, 4294901760
        %877 = vmatmul.mubr.f32.gmra.mrb[0].mxu0 %v876
        %v878 = vpop.f32.mrb[0].mxu0
        %v879 = vadd.f32 %v772, %v878
        %v880 = vpop.f32.mrb[0].mxu0
        %881 = vmatprep.mubr.f32.mxu0 0.0
        %v882 = vand.u32 %v371, 4294901760
        %883 = vmatmul.mubr.f32.gmra.mrb[0].mxu0 %v882
        %v884 = vpop.f32.mrb[0].mxu0
        %v885 = vadd.f32 %v780, %v884
        %v886 = vpop.f32.mrb[0].mxu0
        %887 = vmatprep.mubr.f32.mxu0 0.0
        %v888 = vand.u32 %v374, 4294901760
        %889 = vmatmul.mubr.f32.gmra.mrb[0].mxu0 %v888
        %v890 = vpop.f32.mrb[0].mxu0
        %v891 = vadd.f32 %v788, %v890
        %v892 = vpop.f32.mrb[0].mxu0
        %893 = vmatprep.mubr.f32.mxu0 0.0
        %v894 = vand.u32 %v377, 4294901760
        %895 = vmatmul.mubr.f32.gmra.mrb[0].mxu0 %v894
        %v896 = vpop.f32.mrb[0].mxu0
        %v897 = vadd.f32 %v796, %v896
        %v898 = vpop.f32.mrb[0].mxu0
        %899 = vdwg.mxu0
        %900 = vmatprep.subr.mxu0 0.0
        %v901 = vand.u32 %v326, 4294901760
        %902 = vmatpush1.msra.mxu0 %v901
        %903 = vmatprep.subr.mxu0 0.0
        %v904 = vand.u32 %v327, 4294901760
        %905 = vmatpush1.msra.mxu0 %v904
        %906 = vmatprep.subr.mxu0 0.0
        %v907 = vand.u32 %v328, 4294901760
        %908 = vmatpush1.msra.mxu0 %v907
        %909 = vmatprep.subr.mxu0 0.0
        %v910 = vand.u32 %v329, 4294901760
        %911 = vmatpush1.msra.mxu0 %v910
        %912 = vmatprep.subr.mxu0 0.0
        %913 = vmatpush1.msra.mxu0 0.0
        %914 = vmatprep.subr.mxu0 0.0
        %915 = vmatpush1.msra.mxu0 0.0
        %916 = vmatprep.subr.mxu0 0.0
        %917 = vmatpush1.msra.mxu0 0.0
        %918 = vmatprep.subr.mxu0 0.0
        %919 = vmatpush1.msra.mxu0 0.0
        %920 = vmatprep.subr.mxu0 0.0
        %921 = vmatpush1.msra.mxu0 0.0
        %922 = vmatprep.subr.mxu0 0.0
        %923 = vmatpush1.msra.mxu0 0.0
        %924 = vmatprep.subr.mxu0 0.0
        %925 = vmatpush1.msra.mxu0 0.0
        %926 = vmatprep.subr.mxu0 0.0
        %927 = vmatpush1.msra.mxu0 0.0
        %928 = vmatprep.subr.mxu0 0.0
        %929 = vmatpush1.msra.mxu0 0.0
        %930 = vmatprep.subr.mxu0 0.0
        %931 = vmatpush1.msra.mxu0 0.0
        %932 = vmatprep.subr.mxu0 0.0
        %933 = vmatpush1.msra.mxu0 0.0
        %934 = vmatprep.subr.mxu0 0.0
        %935 = vmatpush1.msra.mxu0 0.0
        %936 = vmatprep.subr.mxu0 0.0
        %937 = vmatpush1.msra.mxu0 0.0
        %938 = vmatprep.subr.mxu0 0.0
        %939 = vmatpush1.msra.mxu0 0.0
        %940 = vmatprep.subr.mxu0 0.0
        %941 = vmatpush1.msra.mxu0 0.0
        %942 = vmatprep.subr.mxu0 0.0
        %943 = vmatpush1.msra.mxu0 0.0
        %944 = vmatprep.subr.mxu0 0.0
        %945 = vmatpush1.msra.mxu0 0.0
        %946 = vmatprep.subr.mxu0 0.0
        %947 = vmatpush1.msra.mxu0 0.0
        %948 = vmatprep.subr.mxu0 0.0
        %949 = vmatpush1.msra.mxu0 0.0
        %950 = vmatprep.subr.mxu0 0.0
        %951 = vmatpush1.msra.mxu0 0.0
        %952 = vmatprep.subr.mxu0 0.0
        %953 = vmatpush1.msra.mxu0 0.0
        %954 = vmatprep.subr.mxu0 0.0
        %955 = vmatpush1.msra.mxu0 0.0
        %956 = vmatprep.subr.mxu0 0.0
        %957 = vmatpush1.msra.mxu0 0.0
        %958 = vmatprep.subr.mxu0 0.0
        %959 = vmatpush1.msra.mxu0 0.0
        %960 = vmatprep.subr.mxu0 0.0
        %961 = vmatpush1.msra.mxu0 0.0
        %962 = vmatprep.subr.mxu0 0.0
        %963 = vmatpush1.msra.mxu0 0.0
        %964 = vmatprep.subr.mxu0 0.0
        %965 = vmatpush1.msra.mxu0 0.0
        %966 = vmatprep.subr.mxu0 0.0
        %967 = vmatpush1.msra.mxu0 0.0
        %968 = vmatprep.mubr.f32.mxu0 0.0
        %v969 = vand.u32 %v368, 4294901760
        %970 = vmatmul.mubr.f32.gmra.mrb[0].mxu0 %v969
        %v971 = vpop.f32.mrb[0].mxu0
        %v972 = vadd.f32 %v879, %v971
        %v973 = vpop.f32.mrb[0].mxu0
        %974 = vmatprep.mubr.f32.mxu0 0.0
        %v975 = vand.u32 %v371, 4294901760
        %976 = vmatmul.mubr.f32.gmra.mrb[0].mxu0 %v975
        %v977 = vpop.f32.mrb[0].mxu0
        %v978 = vadd.f32 %v885, %v977
        %v979 = vpop.f32.mrb[0].mxu0
        %980 = vmatprep.mubr.f32.mxu0 0.0
        %v981 = vand.u32 %v374, 4294901760
        %982 = vmatmul.mubr.f32.gmra.mrb[0].mxu0 %v981
        %v983 = vpop.f32.mrb[0].mxu0
        %v984 = vadd.f32 %v891, %v983
        %v985 = vpop.f32.mrb[0].mxu0
        %986 = vmatprep.mubr.f32.mxu0 0.0
        %v987 = vand.u32 %v377, 4294901760
        %988 = vmatmul.mubr.f32.gmra.mrb[0].mxu0 %v987
        %v989 = vpop.f32.mrb[0].mxu0
        %v990 = vadd.f32 %v897, %v989
        %v991 = vpop.f32.mrb[0].mxu0
        %992 = vdwg.mxu0
        %v993 = vld [vmem:[#allocation8] sm:$0xff]
        %v994 = vld [vmem:[#allocation8 + $0x8] sm:$0xff]
        %v995 = vld [vmem:[#allocation8 + $0x10] sm:$0xff]
        %v996 = vld [vmem:[#allocation8 + $0x18] sm:$0xff]
        %vm997 = vcmask 523264
        %v999 = vsel %vm997, %v993, 0
        %v1002 = vsel %vm997, %v994, 0
        %v1005 = vsel %vm997, %v995, 0
        %v1008 = vsel %vm997, %v996, 0
        %1010 = vmatprep.subr.mxu0 0.0
        %v1011 = vand.u32 %v354, 4294901760
        %1012 = vmatpush1.msra.mxu0 %v1011
        %1013 = vmatprep.subr.mxu0 0.0
        %v1014 = vand.u32 %v355, 4294901760
        %1015 = vmatpush1.msra.mxu0 %v1014
        %1016 = vmatprep.subr.mxu0 0.0
        %v1017 = vand.u32 %v356, 4294901760
        %1018 = vmatpush1.msra.mxu0 %v1017
        %1019 = vmatprep.subr.mxu0 0.0
        %v1020 = vand.u32 %v357, 4294901760
        %1021 = vmatpush1.msra.mxu0 %v1020
        %1022 = vmatprep.subr.mxu0 0.0
        %v1023 = vand.u32 %v358, 4294901760
        %1024 = vmatpush1.msra.mxu0 %v1023
        %1025 = vmatprep.subr.mxu0 0.0
        %v1026 = vand.u32 %v359, 4294901760
        %1027 = vmatpush1.msra.mxu0 %v1026
        %1028 = vmatprep.subr.mxu0 0.0
        %v1029 = vand.u32 %v360, 4294901760
        %1030 = vmatpush1.msra.mxu0 %v1029
        %1031 = vmatprep.subr.mxu0 0.0
        %v1032 = vand.u32 %v361, 4294901760
        %1033 = vmatpush1.msra.mxu0 %v1032
        %1034 = vmatprep.subr.mxu0 0.0
        %1035 = vmatpush1.msra.mxu0 0.0
        %1036 = vmatprep.subr.mxu0 0.0
        %1037 = vmatpush1.msra.mxu0 0.0
        %1038 = vmatprep.subr.mxu0 0.0
        %1039 = vmatpush1.msra.mxu0 0.0
        %1040 = vmatprep.subr.mxu0 0.0
        %1041 = vmatpush1.msra.mxu0 0.0
        %1042 = vmatprep.subr.mxu0 0.0
        %1043 = vmatpush1.msra.mxu0 0.0
        %1044 = vmatprep.subr.mxu0 0.0
        %1045 = vmatpush1.msra.mxu0 0.0
        %1046 = vmatprep.subr.mxu0 0.0
        %1047 = vmatpush1.msra.mxu0 0.0
        %1048 = vmatprep.subr.mxu0 0.0
        %1049 = vmatpush1.msra.mxu0 0.0
        %1050 = vmatprep.subr.mxu0 0.0
        %1051 = vmatpush1.msra.mxu0 0.0
        %1052 = vmatprep.subr.mxu0 0.0
        %1053 = vmatpush1.msra.mxu0 0.0
        %1054 = vmatprep.subr.mxu0 0.0
        %1055 = vmatpush1.msra.mxu0 0.0
        %1056 = vmatprep.subr.mxu0 0.0
        %1057 = vmatpush1.msra.mxu0 0.0
        %1058 = vmatprep.subr.mxu0 0.0
        %1059 = vmatpush1.msra.mxu0 0.0
        %1060 = vmatprep.subr.mxu0 0.0
        %1061 = vmatpush1.msra.mxu0 0.0
        %1062 = vmatprep.subr.mxu0 0.0
        %1063 = vmatpush1.msra.mxu0 0.0
        %1064 = vmatprep.subr.mxu0 0.0
        %1065 = vmatpush1.msra.mxu0 0.0
        %1066 = vmatprep.subr.mxu0 0.0
        %1067 = vmatpush1.msra.mxu0 0.0
        %1068 = vmatprep.subr.mxu0 0.0
        %1069 = vmatpush1.msra.mxu0 0.0
        %1070 = vmatprep.subr.mxu0 0.0
        %1071 = vmatpush1.msra.mxu0 0.0
        %1072 = vmatprep.subr.mxu0 0.0
        %1073 = vmatpush1.msra.mxu0 0.0
        %1074 = vmatprep.subr.mxu0 0.0
        %1075 = vmatpush1.msra.mxu0 0.0
        %1076 = vmatprep.subr.mxu0 0.0
        %1077 = vmatpush1.msra.mxu0 0.0
        %1078 = vmatprep.subr.mxu0 0.0
        %1079 = vmatpush1.msra.mxu0 0.0
        %1080 = vmatprep.subr.mxu0 0.0
        %1081 = vmatpush1.msra.mxu0 0.0
        %1082 = vmatprep.mubr.f32.mxu0 0.0
        %v1083 = vand.u32 %v999, 4294901760
        %v1084 = vsub.f32 %v999, %v1083
        %v1085 = vand.u32 %v1084, 4294901760
        %v1086 = vsub.f32 %v1084, %v1085
        %v1087 = vand.u32 %v1086, 4294901760
        %1088 = vmatmul.mubr.f32.gmra.mrb[0].mxu0 %v1087
        %v1089 = vpop.f32.mrb[0].mxu0
        %v1090 = vadd.f32 0.0, %v1089
        %v1091 = vpop.f32.mrb[0].mxu0
        %1092 = vmatprep.mubr.f32.mxu0 0.0
        %v1093 = vand.u32 %v1002, 4294901760
        %v1094 = vsub.f32 %v1002, %v1093
        %v1095 = vand.u32 %v1094, 4294901760
        %v1096 = vsub.f32 %v1094, %v1095
        %v1097 = vand.u32 %v1096, 4294901760
        %1098 = vmatmul.mubr.f32.gmra.mrb[0].mxu0 %v1097
        %v1099 = vpop.f32.mrb[0].mxu0
        %v1100 = vadd.f32 0.0, %v1099
        %v1101 = vpop.f32.mrb[0].mxu0
        %1102 = vmatprep.mubr.f32.mxu0 0.0
        %v1103 = vand.u32 %v1005, 4294901760
        %v1104 = vsub.f32 %v1005, %v1103
        %v1105 = vand.u32 %v1104, 4294901760
        %v1106 = vsub.f32 %v1104, %v1105
        %v1107 = vand.u32 %v1106, 4294901760
        %1108 = vmatmul.mubr.f32.gmra.mrb[0].mxu0 %v1107
        %v1109 = vpop.f32.mrb[0].mxu0
        %v1110 = vadd.f32 0.0, %v1109
        %v1111 = vpop.f32.mrb[0].mxu0
        %1112 = vmatprep.mubr.f32.mxu0 0.0
        %v1113 = vand.u32 %v1008, 4294901760
        %v1114 = vsub.f32 %v1008, %v1113
        %v1115 = vand.u32 %v1114, 4294901760
        %v1116 = vsub.f32 %v1114, %v1115
        %v1117 = vand.u32 %v1116, 4294901760
        %1118 = vmatmul.mubr.f32.gmra.mrb[0].mxu0 %v1117
        %v1119 = vpop.f32.mrb[0].mxu0
        %v1120 = vadd.f32 0.0, %v1119
        %v1121 = vpop.f32.mrb[0].mxu0
        %1122 = vdwg.mxu0
        %1123 = vmatprep.subr.mxu0 0.0
        %v1124 = vand.u32 %v354, 4294901760
        %v1125 = vsub.f32 %v354, %v1124
        %v1126 = vand.u32 %v1125, 4294901760
        %v1127 = vsub.f32 %v1125, %v1126
        %v1128 = vand.u32 %v1127, 4294901760
        %1129 = vmatpush1.msra.mxu0 %v1128
        %1130 = vmatprep.subr.mxu0 0.0
        %v1131 = vand.u32 %v355, 4294901760
        %v1132 = vsub.f32 %v355, %v1131
        %v1133 = vand.u32 %v1132, 4294901760
        %v1134 = vsub.f32 %v1132, %v1133
        %v1135 = vand.u32 %v1134, 4294901760
        %1136 = vmatpush1.msra.mxu0 %v1135
        %1137 = vmatprep.subr.mxu0 0.0
        %v1138 = vand.u32 %v356, 4294901760
        %v1139 = vsub.f32 %v356, %v1138
        %v1140 = vand.u32 %v1139, 4294901760
        %v1141 = vsub.f32 %v1139, %v1140
        %v1142 = vand.u32 %v1141, 4294901760
        %1143 = vmatpush1.msra.mxu0 %v1142
        %1144 = vmatprep.subr.mxu0 0.0
        %v1145 = vand.u32 %v357, 4294901760
        %v1146 = vsub.f32 %v357, %v1145
        %v1147 = vand.u32 %v1146, 4294901760
        %v1148 = vsub.f32 %v1146, %v1147
        %v1149 = vand.u32 %v1148, 4294901760
        %1150 = vmatpush1.msra.mxu0 %v1149
        %1151 = vmatprep.subr.mxu0 0.0
        %v1152 = vand.u32 %v358, 4294901760
        %v1153 = vsub.f32 %v358, %v1152
        %v1154 = vand.u32 %v1153, 4294901760
        %v1155 = vsub.f32 %v1153, %v1154
        %v1156 = vand.u32 %v1155, 4294901760
        %1157 = vmatpush1.msra.mxu0 %v1156
        %1158 = vmatprep.subr.mxu0 0.0
        %v1159 = vand.u32 %v359, 4294901760
        %v1160 = vsub.f32 %v359, %v1159
        %v1161 = vand.u32 %v1160, 4294901760
        %v1162 = vsub.f32 %v1160, %v1161
        %v1163 = vand.u32 %v1162, 4294901760
        %1164 = vmatpush1.msra.mxu0 %v1163
        %1165 = vmatprep.subr.mxu0 0.0
        %v1166 = vand.u32 %v360, 4294901760
        %v1167 = vsub.f32 %v360, %v1166
        %v1168 = vand.u32 %v1167, 4294901760
        %v1169 = vsub.f32 %v1167, %v1168
        %v1170 = vand.u32 %v1169, 4294901760
        %1171 = vmatpush1.msra.mxu0 %v1170
        %1172 = vmatprep.subr.mxu0 0.0
        %v1173 = vand.u32 %v361, 4294901760
        %v1174 = vsub.f32 %v361, %v1173
        %v1175 = vand.u32 %v1174, 4294901760
        %v1176 = vsub.f32 %v1174, %v1175
        %v1177 = vand.u32 %v1176, 4294901760
        %1178 = vmatpush1.msra.mxu0 %v1177
        %1179 = vmatprep.subr.mxu0 0.0
        %1180 = vmatpush1.msra.mxu0 0.0
        %1181 = vmatprep.subr.mxu0 0.0
        %1182 = vmatpush1.msra.mxu0 0.0
        %1183 = vmatprep.subr.mxu0 0.0
        %1184 = vmatpush1.msra.mxu0 0.0
        %1185 = vmatprep.subr.mxu0 0.0
        %1186 = vmatpush1.msra.mxu0 0.0
        %1187 = vmatprep.subr.mxu0 0.0
        %1188 = vmatpush1.msra.mxu0 0.0
        %1189 = vmatprep.subr.mxu0 0.0
        %1190 = vmatpush1.msra.mxu0 0.0
        %1191 = vmatprep.subr.mxu0 0.0
        %1192 = vmatpush1.msra.mxu0 0.0
        %1193 = vmatprep.subr.mxu0 0.0
        %1194 = vmatpush1.msra.mxu0 0.0
        %1195 = vmatprep.subr.mxu0 0.0
        %1196 = vmatpush1.msra.mxu0 0.0
        %1197 = vmatprep.subr.mxu0 0.0
        %1198 = vmatpush1.msra.mxu0 0.0
        %1199 = vmatprep.subr.mxu0 0.0
        %1200 = vmatpush1.msra.mxu0 0.0
        %1201 = vmatprep.subr.mxu0 0.0
        %1202 = vmatpush1.msra.mxu0 0.0
        %1203 = vmatprep.subr.mxu0 0.0
        %1204 = vmatpush1.msra.mxu0 0.0
        %1205 = vmatprep.subr.mxu0 0.0
        %1206 = vmatpush1.msra.mxu0 0.0
        %1207 = vmatprep.subr.mxu0 0.0
        %1208 = vmatpush1.msra.mxu0 0.0
        %1209 = vmatprep.subr.mxu0 0.0
        %1210 = vmatpush1.msra.mxu0 0.0
        %1211 = vmatprep.subr.mxu0 0.0
        %1212 = vmatpush1.msra.mxu0 0.0
        %1213 = vmatprep.subr.mxu0 0.0
        %1214 = vmatpush1.msra.mxu0 0.0
        %1215 = vmatprep.subr.mxu0 0.0
        %1216 = vmatpush1.msra.mxu0 0.0
        %1217 = vmatprep.subr.mxu0 0.0
        %1218 = vmatpush1.msra.mxu0 0.0
        %1219 = vmatprep.subr.mxu0 0.0
        %1220 = vmatpush1.msra.mxu0 0.0
        %1221 = vmatprep.subr.mxu0 0.0
        %1222 = vmatpush1.msra.mxu0 0.0
        %1223 = vmatprep.subr.mxu0 0.0
        %1224 = vmatpush1.msra.mxu0 0.0
        %1225 = vmatprep.subr.mxu0 0.0
        %1226 = vmatpush1.msra.mxu0 0.0
        %1227 = vmatprep.mubr.f32.mxu0 0.0
        %v1228 = vand.u32 %v999, 4294901760
        %1229 = vmatmul.mubr.f32.gmra.mrb[0].mxu0 %v1228
        %v1230 = vpop.f32.mrb[0].mxu0
        %v1231 = vadd.f32 %v1090, %v1230
        %v1232 = vpop.f32.mrb[0].mxu0
        %1233 = vmatprep.mubr.f32.mxu0 0.0
        %v1234 = vand.u32 %v1002, 4294901760
        %1235 = vmatmul.mubr.f32.gmra.mrb[0].mxu0 %v1234
        %v1236 = vpop.f32.mrb[0].mxu0
        %v1237 = vadd.f32 %v1100, %v1236
        %v1238 = vpop.f32.mrb[0].mxu0
        %1239 = vmatprep.mubr.f32.mxu0 0.0
        %v1240 = vand.u32 %v1005, 4294901760
        %1241 = vmatmul.mubr.f32.gmra.mrb[0].mxu0 %v1240
        %v1242 = vpop.f32.mrb[0].mxu0
        %v1243 = vadd.f32 %v1110, %v1242
        %v1244 = vpop.f32.mrb[0].mxu0
        %1245 = vmatprep.mubr.f32.mxu0 0.0
        %v1246 = vand.u32 %v1008, 4294901760
        %1247 = vmatmul.mubr.f32.gmra.mrb[0].mxu0 %v1246
        %v1248 = vpop.f32.mrb[0].mxu0
        %v1249 = vadd.f32 %v1120, %v1248
        %v1250 = vpop.f32.mrb[0].mxu0
        %1251 = vdwg.mxu0
        %1252 = vmatprep.subr.mxu0 0.0
        %v1253 = vand.u32 %v354, 4294901760
        %v1254 = vsub.f32 %v354, %v1253
        %1255 = vmatpush1.msra.mxu0 %v1254
        %1256 = vmatprep.subr.mxu0 0.0
        %v1257 = vand.u32 %v355, 4294901760
        %v1258 = vsub.f32 %v355, %v1257
        %1259 = vmatpush1.msra.mxu0 %v1258
        %1260 = vmatprep.subr.mxu0 0.0
        %v1261 = vand.u32 %v356, 4294901760
        %v1262 = vsub.f32 %v356, %v1261
        %1263 = vmatpush1.msra.mxu0 %v1262
        %1264 = vmatprep.subr.mxu0 0.0
        %v1265 = vand.u32 %v357, 4294901760
        %v1266 = vsub.f32 %v357, %v1265
        %1267 = vmatpush1.msra.mxu0 %v1266
        %1268 = vmatprep.subr.mxu0 0.0
        %v1269 = vand.u32 %v358, 4294901760
        %v1270 = vsub.f32 %v358, %v1269
        %1271 = vmatpush1.msra.mxu0 %v1270
        %1272 = vmatprep.subr.mxu0 0.0
        %v1273 = vand.u32 %v359, 4294901760
        %v1274 = vsub.f32 %v359, %v1273
        %1275 = vmatpush1.msra.mxu0 %v1274
        %1276 = vmatprep.subr.mxu0 0.0
        %v1277 = vand.u32 %v360, 4294901760
        %v1278 = vsub.f32 %v360, %v1277
        %1279 = vmatpush1.msra.mxu0 %v1278
        %1280 = vmatprep.subr.mxu0 0.0
        %v1281 = vand.u32 %v361, 4294901760
        %v1282 = vsub.f32 %v361, %v1281
        %1283 = vmatpush1.msra.mxu0 %v1282
        %1284 = vmatprep.subr.mxu0 0.0
        %1285 = vmatpush1.msra.mxu0 0.0
        %1286 = vmatprep.subr.mxu0 0.0
        %1287 = vmatpush1.msra.mxu0 0.0
        %1288 = vmatprep.subr.mxu0 0.0
        %1289 = vmatpush1.msra.mxu0 0.0
        %1290 = vmatprep.subr.mxu0 0.0
        %1291 = vmatpush1.msra.mxu0 0.0
        %1292 = vmatprep.subr.mxu0 0.0
        %1293 = vmatpush1.msra.mxu0 0.0
        %1294 = vmatprep.subr.mxu0 0.0
        %1295 = vmatpush1.msra.mxu0 0.0
        %1296 = vmatprep.subr.mxu0 0.0
        %1297 = vmatpush1.msra.mxu0 0.0
        %1298 = vmatprep.subr.mxu0 0.0
        %1299 = vmatpush1.msra.mxu0 0.0
        %1300 = vmatprep.subr.mxu0 0.0
        %1301 = vmatpush1.msra.mxu0 0.0
        %1302 = vmatprep.subr.mxu0 0.0
        %1303 = vmatpush1.msra.mxu0 0.0
        %1304 = vmatprep.subr.mxu0 0.0
        %1305 = vmatpush1.msra.mxu0 0.0
        %1306 = vmatprep.subr.mxu0 0.0
        %1307 = vmatpush1.msra.mxu0 0.0
        %1308 = vmatprep.subr.mxu0 0.0
        %1309 = vmatpush1.msra.mxu0 0.0
        %1310 = vmatprep.subr.mxu0 0.0
        %1311 = vmatpush1.msra.mxu0 0.0
        %1312 = vmatprep.subr.mxu0 0.0
        %1313 = vmatpush1.msra.mxu0 0.0
        %1314 = vmatprep.subr.mxu0 0.0
        %1315 = vmatpush1.msra.mxu0 0.0
        %1316 = vmatprep.subr.mxu0 0.0
        %1317 = vmatpush1.msra.mxu0 0.0
        %1318 = vmatprep.subr.mxu0 0.0
        %1319 = vmatpush1.msra.mxu0 0.0
        %1320 = vmatprep.subr.mxu0 0.0
        %1321 = vmatpush1.msra.mxu0 0.0
        %1322 = vmatprep.subr.mxu0 0.0
        %1323 = vmatpush1.msra.mxu0 0.0
        %1324 = vmatprep.subr.mxu0 0.0
        %1325 = vmatpush1.msra.mxu0 0.0
        %1326 = vmatprep.subr.mxu0 0.0
        %1327 = vmatpush1.msra.mxu0 0.0
        %1328 = vmatprep.subr.mxu0 0.0
        %1329 = vmatpush1.msra.mxu0 0.0
        %1330 = vmatprep.subr.mxu0 0.0
        %1331 = vmatpush1.msra.mxu0 0.0
        %1332 = vmatprep.mubr.f32.mxu0 0.0
        %v1333 = vand.u32 %v999, 4294901760
        %v1334 = vsub.f32 %v999, %v1333
        %1335 = vmatmul.mubr.f32.gmra.mrb[0].mxu0 %v1334
        %v1336 = vpop.f32.mrb[0].mxu0
        %v1337 = vadd.f32 %v1231, %v1336
        %v1338 = vpop.f32.mrb[0].mxu0
        %1339 = vmatprep.mubr.f32.mxu0 0.0
        %v1340 = vand.u32 %v1002, 4294901760
        %v1341 = vsub.f32 %v1002, %v1340
        %1342 = vmatmul.mubr.f32.gmra.mrb[0].mxu0 %v1341
        %v1343 = vpop.f32.mrb[0].mxu0
        %v1344 = vadd.f32 %v1237, %v1343
        %v1345 = vpop.f32.mrb[0].mxu0
        %1346 = vmatprep.mubr.f32.mxu0 0.0
        %v1347 = vand.u32 %v1005, 4294901760
        %v1348 = vsub.f32 %v1005, %v1347
        %1349 = vmatmul.mubr.f32.gmra.mrb[0].mxu0 %v1348
        %v1350 = vpop.f32.mrb[0].mxu0
        %v1351 = vadd.f32 %v1243, %v1350
        %v1352 = vpop.f32.mrb[0].mxu0
        %1353 = vmatprep.mubr.f32.mxu0 0.0
        %v1354 = vand.u32 %v1008, 4294901760
        %v1355 = vsub.f32 %v1008, %v1354
        %1356 = vmatmul.mubr.f32.gmra.mrb[0].mxu0 %v1355
        %v1357 = vpop.f32.mrb[0].mxu0
        %v1358 = vadd.f32 %v1249, %v1357
        %v1359 = vpop.f32.mrb[0].mxu0
        %1360 = vdwg.mxu0
        %1361 = vmatprep.subr.mxu0 0.0
        %v1362 = vand.u32 %v354, 4294901760
        %1363 = vmatpush1.msra.mxu0 %v1362
        %1364 = vmatprep.subr.mxu0 0.0
        %v1365 = vand.u32 %v355, 4294901760
        %1366 = vmatpush1.msra.mxu0 %v1365
        %1367 = vmatprep.subr.mxu0 0.0
        %v1368 = vand.u32 %v356, 4294901760
        %1369 = vmatpush1.msra.mxu0 %v1368
        %1370 = vmatprep.subr.mxu0 0.0
        %v1371 = vand.u32 %v357, 4294901760
        %1372 = vmatpush1.msra.mxu0 %v1371
        %1373 = vmatprep.subr.mxu0 0.0
        %v1374 = vand.u32 %v358, 4294901760
        %1375 = vmatpush1.msra.mxu0 %v1374
        %1376 = vmatprep.subr.mxu0 0.0
        %v1377 = vand.u32 %v359, 4294901760
        %1378 = vmatpush1.msra.mxu0 %v1377
        %1379 = vmatprep.subr.mxu0 0.0
        %v1380 = vand.u32 %v360, 4294901760
        %1381 = vmatpush1.msra.mxu0 %v1380
        %1382 = vmatprep.subr.mxu0 0.0
        %v1383 = vand.u32 %v361, 4294901760
        %1384 = vmatpush1.msra.mxu0 %v1383
        %1385 = vmatprep.subr.mxu0 0.0
        %1386 = vmatpush1.msra.mxu0 0.0
        %1387 = vmatprep.subr.mxu0 0.0
        %1388 = vmatpush1.msra.mxu0 0.0
        %1389 = vmatprep.subr.mxu0 0.0
        %1390 = vmatpush1.msra.mxu0 0.0
        %1391 = vmatprep.subr.mxu0 0.0
        %1392 = vmatpush1.msra.mxu0 0.0
        %1393 = vmatprep.subr.mxu0 0.0
        %1394 = vmatpush1.msra.mxu0 0.0
        %1395 = vmatprep.subr.mxu0 0.0
        %1396 = vmatpush1.msra.mxu0 0.0
        %1397 = vmatprep.subr.mxu0 0.0
        %1398 = vmatpush1.msra.mxu0 0.0
        %1399 = vmatprep.subr.mxu0 0.0
        %1400 = vmatpush1.msra.mxu0 0.0
        %1401 = vmatprep.subr.mxu0 0.0
        %1402 = vmatpush1.msra.mxu0 0.0
        %1403 = vmatprep.subr.mxu0 0.0
        %1404 = vmatpush1.msra.mxu0 0.0
        %1405 = vmatprep.subr.mxu0 0.0
        %1406 = vmatpush1.msra.mxu0 0.0
        %1407 = vmatprep.subr.mxu0 0.0
        %1408 = vmatpush1.msra.mxu0 0.0
        %1409 = vmatprep.subr.mxu0 0.0
        %1410 = vmatpush1.msra.mxu0 0.0
        %1411 = vmatprep.subr.mxu0 0.0
        %1412 = vmatpush1.msra.mxu0 0.0
        %1413 = vmatprep.subr.mxu0 0.0
        %1414 = vmatpush1.msra.mxu0 0.0
        %1415 = vmatprep.subr.mxu0 0.0
        %1416 = vmatpush1.msra.mxu0 0.0
        %1417 = vmatprep.subr.mxu0 0.0
        %1418 = vmatpush1.msra.mxu0 0.0
        %1419 = vmatprep.subr.mxu0 0.0
        %1420 = vmatpush1.msra.mxu0 0.0
        %1421 = vmatprep.subr.mxu0 0.0
        %1422 = vmatpush1.msra.mxu0 0.0
        %1423 = vmatprep.subr.mxu0 0.0
        %1424 = vmatpush1.msra.mxu0 0.0
        %1425 = vmatprep.subr.mxu0 0.0
        %1426 = vmatpush1.msra.mxu0 0.0
        %1427 = vmatprep.subr.mxu0 0.0
        %1428 = vmatpush1.msra.mxu0 0.0
        %1429 = vmatprep.subr.mxu0 0.0
        %1430 = vmatpush1.msra.mxu0 0.0
        %1431 = vmatprep.subr.mxu0 0.0
        %1432 = vmatpush1.msra.mxu0 0.0
        %1433 = vmatprep.mubr.f32.mxu0 0.0
        %v1434 = vand.u32 %v999, 4294901760
        %v1435 = vsub.f32 %v999, %v1434
        %v1436 = vand.u32 %v1435, 4294901760
        %1437 = vmatmul.mubr.f32.gmra.mrb[0].mxu0 %v1436
        %v1438 = vpop.f32.mrb[0].mxu0
        %v1439 = vadd.f32 %v1337, %v1438
        %v1440 = vpop.f32.mrb[0].mxu0
        %1441 = vmatprep.mubr.f32.mxu0 0.0
        %v1442 = vand.u32 %v1002, 4294901760
        %v1443 = vsub.f32 %v1002, %v1442
        %v1444 = vand.u32 %v1443, 4294901760
        %1445 = vmatmul.mubr.f32.gmra.mrb[0].mxu0 %v1444
        %v1446 = vpop.f32.mrb[0].mxu0
        %v1447 = vadd.f32 %v1344, %v1446
        %v1448 = vpop.f32.mrb[0].mxu0
        %1449 = vmatprep.mubr.f32.mxu0 0.0
        %v1450 = vand.u32 %v1005, 4294901760
        %v1451 = vsub.f32 %v1005, %v1450
        %v1452 = vand.u32 %v1451, 4294901760
        %1453 = vmatmul.mubr.f32.gmra.mrb[0].mxu0 %v1452
        %v1454 = vpop.f32.mrb[0].mxu0
        %v1455 = vadd.f32 %v1351, %v1454
        %v1456 = vpop.f32.mrb[0].mxu0
        %1457 = vmatprep.mubr.f32.mxu0 0.0
        %v1458 = vand.u32 %v1008, 4294901760
        %v1459 = vsub.f32 %v1008, %v1458
        %v1460 = vand.u32 %v1459, 4294901760
        %1461 = vmatmul.mubr.f32.gmra.mrb[0].mxu0 %v1460
        %v1462 = vpop.f32.mrb[0].mxu0
        %v1463 = vadd.f32 %v1358, %v1462
        %v1464 = vpop.f32.mrb[0].mxu0
        %1465 = vdwg.mxu0
        %1466 = vmatprep.subr.mxu0 0.0
        %v1467 = vand.u32 %v354, 4294901760
        %v1468 = vsub.f32 %v354, %v1467
        %v1469 = vand.u32 %v1468, 4294901760
        %1470 = vmatpush1.msra.mxu0 %v1469
        %1471 = vmatprep.subr.mxu0 0.0
        %v1472 = vand.u32 %v355, 4294901760
        %v1473 = vsub.f32 %v355, %v1472
        %v1474 = vand.u32 %v1473, 4294901760
        %1475 = vmatpush1.msra.mxu0 %v1474
        %1476 = vmatprep.subr.mxu0 0.0
        %v1477 = vand.u32 %v356, 4294901760
        %v1478 = vsub.f32 %v356, %v1477
        %v1479 = vand.u32 %v1478, 4294901760
        %1480 = vmatpush1.msra.mxu0 %v1479
        %1481 = vmatprep.subr.mxu0 0.0
        %v1482 = vand.u32 %v357, 4294901760
        %v1483 = vsub.f32 %v357, %v1482
        %v1484 = vand.u32 %v1483, 4294901760
        %1485 = vmatpush1.msra.mxu0 %v1484
        %1486 = vmatprep.subr.mxu0 0.0
        %v1487 = vand.u32 %v358, 4294901760
        %v1488 = vsub.f32 %v358, %v1487
        %v1489 = vand.u32 %v1488, 4294901760
        %1490 = vmatpush1.msra.mxu0 %v1489
        %1491 = vmatprep.subr.mxu0 0.0
        %v1492 = vand.u32 %v359, 4294901760
        %v1493 = vsub.f32 %v359, %v1492
        %v1494 = vand.u32 %v1493, 4294901760
        %1495 = vmatpush1.msra.mxu0 %v1494
        %1496 = vmatprep.subr.mxu0 0.0
        %v1497 = vand.u32 %v360, 4294901760
        %v1498 = vsub.f32 %v360, %v1497
        %v1499 = vand.u32 %v1498, 4294901760
        %1500 = vmatpush1.msra.mxu0 %v1499
        %1501 = vmatprep.subr.mxu0 0.0
        %v1502 = vand.u32 %v361, 4294901760
        %v1503 = vsub.f32 %v361, %v1502
        %v1504 = vand.u32 %v1503, 4294901760
        %1505 = vmatpush1.msra.mxu0 %v1504
        %1506 = vmatprep.subr.mxu0 0.0
        %1507 = vmatpush1.msra.mxu0 0.0
        %1508 = vmatprep.subr.mxu0 0.0
        %1509 = vmatpush1.msra.mxu0 0.0
        %1510 = vmatprep.subr.mxu0 0.0
        %1511 = vmatpush1.msra.mxu0 0.0
        %1512 = vmatprep.subr.mxu0 0.0
        %1513 = vmatpush1.msra.mxu0 0.0
        %1514 = vmatprep.subr.mxu0 0.0
        %1515 = vmatpush1.msra.mxu0 0.0
        %1516 = vmatprep.subr.mxu0 0.0
        %1517 = vmatpush1.msra.mxu0 0.0
        %1518 = vmatprep.subr.mxu0 0.0
        %1519 = vmatpush1.msra.mxu0 0.0
        %1520 = vmatprep.subr.mxu0 0.0
        %1521 = vmatpush1.msra.mxu0 0.0
        %1522 = vmatprep.subr.mxu0 0.0
        %1523 = vmatpush1.msra.mxu0 0.0
        %1524 = vmatprep.subr.mxu0 0.0
        %1525 = vmatpush1.msra.mxu0 0.0
        %1526 = vmatprep.subr.mxu0 0.0
        %1527 = vmatpush1.msra.mxu0 0.0
        %1528 = vmatprep.subr.mxu0 0.0
        %1529 = vmatpush1.msra.mxu0 0.0
        %1530 = vmatprep.subr.mxu0 0.0
        %1531 = vmatpush1.msra.mxu0 0.0
        %1532 = vmatprep.subr.mxu0 0.0
        %1533 = vmatpush1.msra.mxu0 0.0
        %1534 = vmatprep.subr.mxu0 0.0
        %1535 = vmatpush1.msra.mxu0 0.0
        %1536 = vmatprep.subr.mxu0 0.0
        %1537 = vmatpush1.msra.mxu0 0.0
        %1538 = vmatprep.subr.mxu0 0.0
        %1539 = vmatpush1.msra.mxu0 0.0
        %1540 = vmatprep.subr.mxu0 0.0
        %1541 = vmatpush1.msra.mxu0 0.0
        %1542 = vmatprep.subr.mxu0 0.0
        %1543 = vmatpush1.msra.mxu0 0.0
        %1544 = vmatprep.subr.mxu0 0.0
        %1545 = vmatpush1.msra.mxu0 0.0
        %1546 = vmatprep.subr.mxu0 0.0
        %1547 = vmatpush1.msra.mxu0 0.0
        %1548 = vmatprep.subr.mxu0 0.0
        %1549 = vmatpush1.msra.mxu0 0.0
        %1550 = vmatprep.subr.mxu0 0.0
        %1551 = vmatpush1.msra.mxu0 0.0
        %1552 = vmatprep.subr.mxu0 0.0
        %1553 = vmatpush1.msra.mxu0 0.0
        %1554 = vmatprep.mubr.f32.mxu0 0.0
        %v1555 = vand.u32 %v999, 4294901760
        %1556 = vmatmul.mubr.f32.gmra.mrb[0].mxu0 %v1555
        %v1557 = vpop.f32.mrb[0].mxu0
        %v1558 = vadd.f32 %v1439, %v1557
        %v1559 = vpop.f32.mrb[0].mxu0
        %1560 = vmatprep.mubr.f32.mxu0 0.0
        %v1561 = vand.u32 %v1002, 4294901760
        %1562 = vmatmul.mubr.f32.gmra.mrb[0].mxu0 %v1561
        %v1563 = vpop.f32.mrb[0].mxu0
        %v1564 = vadd.f32 %v1447, %v1563
        %v1565 = vpop.f32.mrb[0].mxu0
        %1566 = vmatprep.mubr.f32.mxu0 0.0
        %v1567 = vand.u32 %v1005, 4294901760
        %1568 = vmatmul.mubr.f32.gmra.mrb[0].mxu0 %v1567
        %v1569 = vpop.f32.mrb[0].mxu0
        %v1570 = vadd.f32 %v1455, %v1569
        %v1571 = vpop.f32.mrb[0].mxu0
        %1572 = vmatprep.mubr.f32.mxu0 0.0
        %v1573 = vand.u32 %v1008, 4294901760
        %1574 = vmatmul.mubr.f32.gmra.mrb[0].mxu0 %v1573
        %v1575 = vpop.f32.mrb[0].mxu0
        %v1576 = vadd.f32 %v1463, %v1575
        %v1577 = vpop.f32.mrb[0].mxu0
        %1578 = vdwg.mxu0
        %1579 = vmatprep.subr.mxu0 0.0
        %v1580 = vand.u32 %v354, 4294901760
        %1581 = vmatpush1.msra.mxu0 %v1580
        %1582 = vmatprep.subr.mxu0 0.0
        %v1583 = vand.u32 %v355, 4294901760
        %1584 = vmatpush1.msra.mxu0 %v1583
        %1585 = vmatprep.subr.mxu0 0.0
        %v1586 = vand.u32 %v356, 4294901760
        %1587 = vmatpush1.msra.mxu0 %v1586
        %1588 = vmatprep.subr.mxu0 0.0
        %v1589 = vand.u32 %v357, 4294901760
        %1590 = vmatpush1.msra.mxu0 %v1589
        %1591 = vmatprep.subr.mxu0 0.0
        %v1592 = vand.u32 %v358, 4294901760
        %1593 = vmatpush1.msra.mxu0 %v1592
        %1594 = vmatprep.subr.mxu0 0.0
        %v1595 = vand.u32 %v359, 4294901760
        %1596 = vmatpush1.msra.mxu0 %v1595
        %1597 = vmatprep.subr.mxu0 0.0
        %v1598 = vand.u32 %v360, 4294901760
        %1599 = vmatpush1.msra.mxu0 %v1598
        %1600 = vmatprep.subr.mxu0 0.0
        %v1601 = vand.u32 %v361, 4294901760
        %1602 = vmatpush1.msra.mxu0 %v1601
        %1603 = vmatprep.subr.mxu0 0.0
        %1604 = vmatpush1.msra.mxu0 0.0
        %1605 = vmatprep.subr.mxu0 0.0
        %1606 = vmatpush1.msra.mxu0 0.0
        %1607 = vmatprep.subr.mxu0 0.0
        %1608 = vmatpush1.msra.mxu0 0.0
        %1609 = vmatprep.subr.mxu0 0.0
        %1610 = vmatpush1.msra.mxu0 0.0
        %1611 = vmatprep.subr.mxu0 0.0
        %1612 = vmatpush1.msra.mxu0 0.0
        %1613 = vmatprep.subr.mxu0 0.0
        %1614 = vmatpush1.msra.mxu0 0.0
        %1615 = vmatprep.subr.mxu0 0.0
        %1616 = vmatpush1.msra.mxu0 0.0
        %1617 = vmatprep.subr.mxu0 0.0
        %1618 = vmatpush1.msra.mxu0 0.0
        %1619 = vmatprep.subr.mxu0 0.0
        %1620 = vmatpush1.msra.mxu0 0.0
        %1621 = vmatprep.subr.mxu0 0.0
        %1622 = vmatpush1.msra.mxu0 0.0
        %1623 = vmatprep.subr.mxu0 0.0
        %1624 = vmatpush1.msra.mxu0 0.0
        %1625 = vmatprep.subr.mxu0 0.0
        %1626 = vmatpush1.msra.mxu0 0.0
        %1627 = vmatprep.subr.mxu0 0.0
        %1628 = vmatpush1.msra.mxu0 0.0
        %1629 = vmatprep.subr.mxu0 0.0
        %1630 = vmatpush1.msra.mxu0 0.0
        %1631 = vmatprep.subr.mxu0 0.0
        %1632 = vmatpush1.msra.mxu0 0.0
        %1633 = vmatprep.subr.mxu0 0.0
        %1634 = vmatpush1.msra.mxu0 0.0
        %1635 = vmatprep.subr.mxu0 0.0
        %1636 = vmatpush1.msra.mxu0 0.0
        %1637 = vmatprep.subr.mxu0 0.0
        %1638 = vmatpush1.msra.mxu0 0.0
        %1639 = vmatprep.subr.mxu0 0.0
        %1640 = vmatpush1.msra.mxu0 0.0
        %1641 = vmatprep.subr.mxu0 0.0
        %1642 = vmatpush1.msra.mxu0 0.0
        %1643 = vmatprep.subr.mxu0 0.0
        %1644 = vmatpush1.msra.mxu0 0.0
        %1645 = vmatprep.subr.mxu0 0.0
        %1646 = vmatpush1.msra.mxu0 0.0
        %1647 = vmatprep.subr.mxu0 0.0
        %1648 = vmatpush1.msra.mxu0 0.0
        %1649 = vmatprep.subr.mxu0 0.0
        %1650 = vmatpush1.msra.mxu0 0.0
        %1651 = vmatprep.mubr.f32.mxu0 0.0
        %v1652 = vand.u32 %v999, 4294901760
        %1653 = vmatmul.mubr.f32.gmra.mrb[0].mxu0 %v1652
        %v1654 = vpop.f32.mrb[0].mxu0
        %v1655 = vadd.f32 %v1558, %v1654
        %v1656 = vpop.f32.mrb[0].mxu0
        %1657 = vmatprep.mubr.f32.mxu0 0.0
        %v1658 = vand.u32 %v1002, 4294901760
        %1659 = vmatmul.mubr.f32.gmra.mrb[0].mxu0 %v1658
        %v1660 = vpop.f32.mrb[0].mxu0
        %v1661 = vadd.f32 %v1564, %v1660
        %v1662 = vpop.f32.mrb[0].mxu0
        %1663 = vmatprep.mubr.f32.mxu0 0.0
        %v1664 = vand.u32 %v1005, 4294901760
        %1665 = vmatmul.mubr.f32.gmra.mrb[0].mxu0 %v1664
        %v1666 = vpop.f32.mrb[0].mxu0
        %v1667 = vadd.f32 %v1570, %v1666
        %v1668 = vpop.f32.mrb[0].mxu0
        %1669 = vmatprep.mubr.f32.mxu0 0.0
        %v1670 = vand.u32 %v1008, 4294901760
        %1671 = vmatmul.mubr.f32.gmra.mrb[0].mxu0 %v1670
        %v1672 = vpop.f32.mrb[0].mxu0
        %v1673 = vadd.f32 %v1576, %v1672
        %v1674 = vpop.f32.mrb[0].mxu0
        %1675 = vdwg.mxu0
        %v1676 = vmul.f32 %v972, %v1655
        %v1677 = vmul.f32 %v978, %v1661
        %v1678 = vmul.f32 %v984, %v1667
        %v1679 = vmul.f32 %v990, %v1673
        %v1680 = vld [vmem:[%s4] sm:$0x1]
        %s1681 = sld [smem:[#allocation2]]
        %v1682 = vstv %s1681
        %v1684 = vsel %vm366, %v1680, 0
        %1686 = vmatprep.subr.mxu0 0.0
        %v1687 = vand.u32 %v1676, 4294901760
        %1688 = vmatpush1.msra.mxu0 %v1687
        %1689 = vmatprep.subr.mxu0 0.0
        %v1690 = vand.u32 %v1677, 4294901760
        %1691 = vmatpush1.msra.mxu0 %v1690
        %1692 = vmatprep.subr.mxu0 0.0
        %v1693 = vand.u32 %v1678, 4294901760
        %1694 = vmatpush1.msra.mxu0 %v1693
        %1695 = vmatprep.subr.mxu0 0.0
        %v1696 = vand.u32 %v1679, 4294901760
        %1697 = vmatpush1.msra.mxu0 %v1696
        %1698 = vmatprep.subr.mxu0 0.0
        %1699 = vmatpush1.msra.mxu0 0.0
        %1700 = vmatprep.subr.mxu0 0.0
        %1701 = vmatpush1.msra.mxu0 0.0
        %1702 = vmatprep.subr.mxu0 0.0
        %1703 = vmatpush1.msra.mxu0 0.0
        %1704 = vmatprep.subr.mxu0 0.0
        %1705 = vmatpush1.msra.mxu0 0.0
        %1706 = vmatprep.subr.mxu0 0.0
        %1707 = vmatpush1.msra.mxu0 0.0
        %1708 = vmatprep.subr.mxu0 0.0
        %1709 = vmatpush1.msra.mxu0 0.0
        %1710 = vmatprep.subr.mxu0 0.0
        %1711 = vmatpush1.msra.mxu0 0.0
        %1712 = vmatprep.subr.mxu0 0.0
        %1713 = vmatpush1.msra.mxu0 0.0
        %1714 = vmatprep.subr.mxu0 0.0
        %1715 = vmatpush1.msra.mxu0 0.0
        %1716 = vmatprep.subr.mxu0 0.0
        %1717 = vmatpush1.msra.mxu0 0.0
        %1718 = vmatprep.subr.mxu0 0.0
        %1719 = vmatpush1.msra.mxu0 0.0
        %1720 = vmatprep.subr.mxu0 0.0
        %1721 = vmatpush1.msra.mxu0 0.0
        %1722 = vmatprep.subr.mxu0 0.0
        %1723 = vmatpush1.msra.mxu0 0.0
        %1724 = vmatprep.subr.mxu0 0.0
        %1725 = vmatpush1.msra.mxu0 0.0
        %1726 = vmatprep.subr.mxu0 0.0
        %1727 = vmatpush1.msra.mxu0 0.0
        %1728 = vmatprep.subr.mxu0 0.0
        %1729 = vmatpush1.msra.mxu0 0.0
        %1730 = vmatprep.subr.mxu0 0.0
        %1731 = vmatpush1.msra.mxu0 0.0
        %1732 = vmatprep.subr.mxu0 0.0
        %1733 = vmatpush1.msra.mxu0 0.0
        %1734 = vmatprep.subr.mxu0 0.0
        %1735 = vmatpush1.msra.mxu0 0.0
        %1736 = vmatprep.subr.mxu0 0.0
        %1737 = vmatpush1.msra.mxu0 0.0
        %1738 = vmatprep.subr.mxu0 0.0
        %1739 = vmatpush1.msra.mxu0 0.0
        %1740 = vmatprep.subr.mxu0 0.0
        %1741 = vmatpush1.msra.mxu0 0.0
        %1742 = vmatprep.subr.mxu0 0.0
        %1743 = vmatpush1.msra.mxu0 0.0
        %1744 = vmatprep.subr.mxu0 0.0
        %1745 = vmatpush1.msra.mxu0 0.0
        %1746 = vmatprep.subr.mxu0 0.0
        %1747 = vmatpush1.msra.mxu0 0.0
        %1748 = vmatprep.subr.mxu0 0.0
        %1749 = vmatpush1.msra.mxu0 0.0
        %1750 = vmatprep.subr.mxu0 0.0
        %1751 = vmatpush1.msra.mxu0 0.0
        %1752 = vmatprep.subr.mxu0 0.0
        %1753 = vmatpush1.msra.mxu0 0.0
        %1754 = vmatprep.mubr.f32.mxu0 0.0
        %v1755 = vand.u32 %v1684, 4294901760
        %v1756 = vsub.f32 %v1684, %v1755
        %v1757 = vand.u32 %v1756, 4294901760
        %v1758 = vsub.f32 %v1756, %v1757
        %v1759 = vand.u32 %v1758, 4294901760
        %1760 = vmatmul.mubr.f32.gmra.mrb[0].mxu0 %v1759
        %v1761 = vpop.f32.mrb[0].mxu0
        %v1762 = vadd.f32 %v1682, %v1761
        %v1763 = vpop.f32.mrb[0].mxu0
        %1764 = vdwg.mxu0
        %1765 = vmatprep.subr.mxu0 0.0
        %v1766 = vand.u32 %v1676, 4294901760
        %v1767 = vsub.f32 %v1676, %v1766
        %v1768 = vand.u32 %v1767, 4294901760
        %v1769 = vsub.f32 %v1767, %v1768
        %v1770 = vand.u32 %v1769, 4294901760
        %1771 = vmatpush1.msra.mxu0 %v1770
        %1772 = vmatprep.subr.mxu0 0.0
        %v1773 = vand.u32 %v1677, 4294901760
        %v1774 = vsub.f32 %v1677, %v1773
        %v1775 = vand.u32 %v1774, 4294901760
        %v1776 = vsub.f32 %v1774, %v1775
        %v1777 = vand.u32 %v1776, 4294901760
        %1778 = vmatpush1.msra.mxu0 %v1777
        %1779 = vmatprep.subr.mxu0 0.0
        %v1780 = vand.u32 %v1678, 4294901760
        %v1781 = vsub.f32 %v1678, %v1780
        %v1782 = vand.u32 %v1781, 4294901760
        %v1783 = vsub.f32 %v1781, %v1782
        %v1784 = vand.u32 %v1783, 4294901760
        %1785 = vmatpush1.msra.mxu0 %v1784
        %1786 = vmatprep.subr.mxu0 0.0
        %v1787 = vand.u32 %v1679, 4294901760
        %v1788 = vsub.f32 %v1679, %v1787
        %v1789 = vand.u32 %v1788, 4294901760
        %v1790 = vsub.f32 %v1788, %v1789
        %v1791 = vand.u32 %v1790, 4294901760
        %1792 = vmatpush1.msra.mxu0 %v1791
        %1793 = vmatprep.subr.mxu0 0.0
        %1794 = vmatpush1.msra.mxu0 0.0
        %1795 = vmatprep.subr.mxu0 0.0
        %1796 = vmatpush1.msra.mxu0 0.0
        %1797 = vmatprep.subr.mxu0 0.0
        %1798 = vmatpush1.msra.mxu0 0.0
        %1799 = vmatprep.subr.mxu0 0.0
        %1800 = vmatpush1.msra.mxu0 0.0
        %1801 = vmatprep.subr.mxu0 0.0
        %1802 = vmatpush1.msra.mxu0 0.0
        %1803 = vmatprep.subr.mxu0 0.0
        %1804 = vmatpush1.msra.mxu0 0.0
        %1805 = vmatprep.subr.mxu0 0.0
        %1806 = vmatpush1.msra.mxu0 0.0
        %1807 = vmatprep.subr.mxu0 0.0
        %1808 = vmatpush1.msra.mxu0 0.0
        %1809 = vmatprep.subr.mxu0 0.0
        %1810 = vmatpush1.msra.mxu0 0.0
        %1811 = vmatprep.subr.mxu0 0.0
        %1812 = vmatpush1.msra.mxu0 0.0
        %1813 = vmatprep.subr.mxu0 0.0
        %1814 = vmatpush1.msra.mxu0 0.0
        %1815 = vmatprep.subr.mxu0 0.0
        %1816 = vmatpush1.msra.mxu0 0.0
        %1817 = vmatprep.subr.mxu0 0.0
        %1818 = vmatpush1.msra.mxu0 0.0
        %1819 = vmatprep.subr.mxu0 0.0
        %1820 = vmatpush1.msra.mxu0 0.0
        %1821 = vmatprep.subr.mxu0 0.0
        %1822 = vmatpush1.msra.mxu0 0.0
        %1823 = vmatprep.subr.mxu0 0.0
        %1824 = vmatpush1.msra.mxu0 0.0
        %1825 = vmatprep.subr.mxu0 0.0
        %1826 = vmatpush1.msra.mxu0 0.0
        %1827 = vmatprep.subr.mxu0 0.0
        %1828 = vmatpush1.msra.mxu0 0.0
        %1829 = vmatprep.subr.mxu0 0.0
        %1830 = vmatpush1.msra.mxu0 0.0
        %1831 = vmatprep.subr.mxu0 0.0
        %1832 = vmatpush1.msra.mxu0 0.0
        %1833 = vmatprep.subr.mxu0 0.0
        %1834 = vmatpush1.msra.mxu0 0.0
        %1835 = vmatprep.subr.mxu0 0.0
        %1836 = vmatpush1.msra.mxu0 0.0
        %1837 = vmatprep.subr.mxu0 0.0
        %1838 = vmatpush1.msra.mxu0 0.0
        %1839 = vmatprep.subr.mxu0 0.0
        %1840 = vmatpush1.msra.mxu0 0.0
        %1841 = vmatprep.subr.mxu0 0.0
        %1842 = vmatpush1.msra.mxu0 0.0
        %1843 = vmatprep.subr.mxu0 0.0
        %1844 = vmatpush1.msra.mxu0 0.0
        %1845 = vmatprep.subr.mxu0 0.0
        %1846 = vmatpush1.msra.mxu0 0.0
        %1847 = vmatprep.subr.mxu0 0.0
        %1848 = vmatpush1.msra.mxu0 0.0
        %1849 = vmatprep.mubr.f32.mxu0 0.0
        %v1850 = vand.u32 %v1684, 4294901760
        %1851 = vmatmul.mubr.f32.gmra.mrb[0].mxu0 %v1850
        %v1852 = vpop.f32.mrb[0].mxu0
        %v1853 = vadd.f32 %v1762, %v1852
        %v1854 = vpop.f32.mrb[0].mxu0
        %1855 = vdwg.mxu0
        %1856 = vmatprep.subr.mxu0 0.0
        %v1857 = vand.u32 %v1676, 4294901760
        %v1858 = vsub.f32 %v1676, %v1857
        %1859 = vmatpush1.msra.mxu0 %v1858
        %1860 = vmatprep.subr.mxu0 0.0
        %v1861 = vand.u32 %v1677, 4294901760
        %v1862 = vsub.f32 %v1677, %v1861
        %1863 = vmatpush1.msra.mxu0 %v1862
        %1864 = vmatprep.subr.mxu0 0.0
        %v1865 = vand.u32 %v1678, 4294901760
        %v1866 = vsub.f32 %v1678, %v1865
        %1867 = vmatpush1.msra.mxu0 %v1866
        %1868 = vmatprep.subr.mxu0 0.0
        %v1869 = vand.u32 %v1679, 4294901760
        %v1870 = vsub.f32 %v1679, %v1869
        %1871 = vmatpush1.msra.mxu0 %v1870
        %1872 = vmatprep.subr.mxu0 0.0
        %1873 = vmatpush1.msra.mxu0 0.0
        %1874 = vmatprep.subr.mxu0 0.0
        %1875 = vmatpush1.msra.mxu0 0.0
        %1876 = vmatprep.subr.mxu0 0.0
        %1877 = vmatpush1.msra.mxu0 0.0
        %1878 = vmatprep.subr.mxu0 0.0
        %1879 = vmatpush1.msra.mxu0 0.0
        %1880 = vmatprep.subr.mxu0 0.0
        %1881 = vmatpush1.msra.mxu0 0.0
        %1882 = vmatprep.subr.mxu0 0.0
        %1883 = vmatpush1.msra.mxu0 0.0
        %1884 = vmatprep.subr.mxu0 0.0
        %1885 = vmatpush1.msra.mxu0 0.0
        %1886 = vmatprep.subr.mxu0 0.0
        %1887 = vmatpush1.msra.mxu0 0.0
        %1888 = vmatprep.subr.mxu0 0.0
        %1889 = vmatpush1.msra.mxu0 0.0
        %1890 = vmatprep.subr.mxu0 0.0
        %1891 = vmatpush1.msra.mxu0 0.0
        %1892 = vmatprep.subr.mxu0 0.0
        %1893 = vmatpush1.msra.mxu0 0.0
        %1894 = vmatprep.subr.mxu0 0.0
        %1895 = vmatpush1.msra.mxu0 0.0
        %1896 = vmatprep.subr.mxu0 0.0
        %1897 = vmatpush1.msra.mxu0 0.0
        %1898 = vmatprep.subr.mxu0 0.0
        %1899 = vmatpush1.msra.mxu0 0.0
        %1900 = vmatprep.subr.mxu0 0.0
        %1901 = vmatpush1.msra.mxu0 0.0
        %1902 = vmatprep.subr.mxu0 0.0
        %1903 = vmatpush1.msra.mxu0 0.0
        %1904 = vmatprep.subr.mxu0 0.0
        %1905 = vmatpush1.msra.mxu0 0.0
        %1906 = vmatprep.subr.mxu0 0.0
        %1907 = vmatpush1.msra.mxu0 0.0
        %1908 = vmatprep.subr.mxu0 0.0
        %1909 = vmatpush1.msra.mxu0 0.0
        %1910 = vmatprep.subr.mxu0 0.0
        %1911 = vmatpush1.msra.mxu0 0.0
        %1912 = vmatprep.subr.mxu0 0.0
        %1913 = vmatpush1.msra.mxu0 0.0
        %1914 = vmatprep.subr.mxu0 0.0
        %1915 = vmatpush1.msra.mxu0 0.0
        %1916 = vmatprep.subr.mxu0 0.0
        %1917 = vmatpush1.msra.mxu0 0.0
        %1918 = vmatprep.subr.mxu0 0.0
        %1919 = vmatpush1.msra.mxu0 0.0
        %1920 = vmatprep.subr.mxu0 0.0
        %1921 = vmatpush1.msra.mxu0 0.0
        %1922 = vmatprep.subr.mxu0 0.0
        %1923 = vmatpush1.msra.mxu0 0.0
        %1924 = vmatprep.subr.mxu0 0.0
        %1925 = vmatpush1.msra.mxu0 0.0
        %1926 = vmatprep.subr.mxu0 0.0
        %1927 = vmatpush1.msra.mxu0 0.0
        %1928 = vmatprep.mubr.f32.mxu0 0.0
        %v1929 = vand.u32 %v1684, 4294901760
        %v1930 = vsub.f32 %v1684, %v1929
        %1931 = vmatmul.mubr.f32.gmra.mrb[0].mxu0 %v1930
        %v1932 = vpop.f32.mrb[0].mxu0
        %v1933 = vadd.f32 %v1853, %v1932
        %v1934 = vpop.f32.mrb[0].mxu0
        %1935 = vdwg.mxu0
        %1936 = vmatprep.subr.mxu0 0.0
        %v1937 = vand.u32 %v1676, 4294901760
        %1938 = vmatpush1.msra.mxu0 %v1937
        %1939 = vmatprep.subr.mxu0 0.0
        %v1940 = vand.u32 %v1677, 4294901760
        %1941 = vmatpush1.msra.mxu0 %v1940
        %1942 = vmatprep.subr.mxu0 0.0
        %v1943 = vand.u32 %v1678, 4294901760
        %1944 = vmatpush1.msra.mxu0 %v1943
        %1945 = vmatprep.subr.mxu0 0.0
        %v1946 = vand.u32 %v1679, 4294901760
        %1947 = vmatpush1.msra.mxu0 %v1946
        %1948 = vmatprep.subr.mxu0 0.0
        %1949 = vmatpush1.msra.mxu0 0.0
        %1950 = vmatprep.subr.mxu0 0.0
        %1951 = vmatpush1.msra.mxu0 0.0
        %1952 = vmatprep.subr.mxu0 0.0
        %1953 = vmatpush1.msra.mxu0 0.0
        %1954 = vmatprep.subr.mxu0 0.0
        %1955 = vmatpush1.msra.mxu0 0.0
        %1956 = vmatprep.subr.mxu0 0.0
        %1957 = vmatpush1.msra.mxu0 0.0
        %1958 = vmatprep.subr.mxu0 0.0
        %1959 = vmatpush1.msra.mxu0 0.0
        %1960 = vmatprep.subr.mxu0 0.0
        %1961 = vmatpush1.msra.mxu0 0.0
        %1962 = vmatprep.subr.mxu0 0.0
        %1963 = vmatpush1.msra.mxu0 0.0
        %1964 = vmatprep.subr.mxu0 0.0
        %1965 = vmatpush1.msra.mxu0 0.0
        %1966 = vmatprep.subr.mxu0 0.0
        %1967 = vmatpush1.msra.mxu0 0.0
        %1968 = vmatprep.subr.mxu0 0.0
        %1969 = vmatpush1.msra.mxu0 0.0
        %1970 = vmatprep.subr.mxu0 0.0
        %1971 = vmatpush1.msra.mxu0 0.0
        %1972 = vmatprep.subr.mxu0 0.0
        %1973 = vmatpush1.msra.mxu0 0.0
        %1974 = vmatprep.subr.mxu0 0.0
        %1975 = vmatpush1.msra.mxu0 0.0
        %1976 = vmatprep.subr.mxu0 0.0
        %1977 = vmatpush1.msra.mxu0 0.0
        %1978 = vmatprep.subr.mxu0 0.0
        %1979 = vmatpush1.msra.mxu0 0.0
        %1980 = vmatprep.subr.mxu0 0.0
        %1981 = vmatpush1.msra.mxu0 0.0
        %1982 = vmatprep.subr.mxu0 0.0
        %1983 = vmatpush1.msra.mxu0 0.0
        %1984 = vmatprep.subr.mxu0 0.0
        %1985 = vmatpush1.msra.mxu0 0.0
        %1986 = vmatprep.subr.mxu0 0.0
        %1987 = vmatpush1.msra.mxu0 0.0
        %1988 = vmatprep.subr.mxu0 0.0
        %1989 = vmatpush1.msra.mxu0 0.0
        %1990 = vmatprep.subr.mxu0 0.0
        %1991 = vmatpush1.msra.mxu0 0.0
        %1992 = vmatprep.subr.mxu0 0.0
        %1993 = vmatpush1.msra.mxu0 0.0
        %1994 = vmatprep.subr.mxu0 0.0
        %1995 = vmatpush1.msra.mxu0 0.0
        %1996 = vmatprep.subr.mxu0 0.0
        %1997 = vmatpush1.msra.mxu0 0.0
        %1998 = vmatprep.subr.mxu0 0.0
        %1999 = vmatpush1.msra.mxu0 0.0
        %2000 = vmatprep.subr.mxu0 0.0
        %2001 = vmatpush1.msra.mxu0 0.0
        %2002 = vmatprep.subr.mxu0 0.0
        %2003 = vmatpush1.msra.mxu0 0.0
        %2004 = vmatprep.mubr.f32.mxu0 0.0
        %v2005 = vand.u32 %v1684, 4294901760
        %v2006 = vsub.f32 %v1684, %v2005
        %v2007 = vand.u32 %v2006, 4294901760
        %2008 = vmatmul.mubr.f32.gmra.mrb[0].mxu0 %v2007
        %v2009 = vpop.f32.mrb[0].mxu0
        %v2010 = vadd.f32 %v1933, %v2009
        %v2011 = vpop.f32.mrb[0].mxu0
        %2012 = vdwg.mxu0
        %2013 = vmatprep.subr.mxu0 0.0
        %v2014 = vand.u32 %v1676, 4294901760
        %v2015 = vsub.f32 %v1676, %v2014
        %v2016 = vand.u32 %v2015, 4294901760
        %2017 = vmatpush1.msra.mxu0 %v2016
        %2018 = vmatprep.subr.mxu0 0.0
        %v2019 = vand.u32 %v1677, 4294901760
        %v2020 = vsub.f32 %v1677, %v2019
        %v2021 = vand.u32 %v2020, 4294901760
        %2022 = vmatpush1.msra.mxu0 %v2021
        %2023 = vmatprep.subr.mxu0 0.0
        %v2024 = vand.u32 %v1678, 4294901760
        %v2025 = vsub.f32 %v1678, %v2024
        %v2026 = vand.u32 %v2025, 4294901760
        %2027 = vmatpush1.msra.mxu0 %v2026
        %2028 = vmatprep.subr.mxu0 0.0
        %v2029 = vand.u32 %v1679, 4294901760
        %v2030 = vsub.f32 %v1679, %v2029
        %v2031 = vand.u32 %v2030, 4294901760
        %2032 = vmatpush1.msra.mxu0 %v2031
        %2033 = vmatprep.subr.mxu0 0.0
        %2034 = vmatpush1.msra.mxu0 0.0
        %2035 = vmatprep.subr.mxu0 0.0
        %2036 = vmatpush1.msra.mxu0 0.0
        %2037 = vmatprep.subr.mxu0 0.0
        %2038 = vmatpush1.msra.mxu0 0.0
        %2039 = vmatprep.subr.mxu0 0.0
        %2040 = vmatpush1.msra.mxu0 0.0
        %2041 = vmatprep.subr.mxu0 0.0
        %2042 = vmatpush1.msra.mxu0 0.0
        %2043 = vmatprep.subr.mxu0 0.0
        %2044 = vmatpush1.msra.mxu0 0.0
        %2045 = vmatprep.subr.mxu0 0.0
        %2046 = vmatpush1.msra.mxu0 0.0
        %2047 = vmatprep.subr.mxu0 0.0
        %2048 = vmatpush1.msra.mxu0 0.0
        %2049 = vmatprep.subr.mxu0 0.0
        %2050 = vmatpush1.msra.mxu0 0.0
        %2051 = vmatprep.subr.mxu0 0.0
        %2052 = vmatpush1.msra.mxu0 0.0
        %2053 = vmatprep.subr.mxu0 0.0
        %2054 = vmatpush1.msra.mxu0 0.0
        %2055 = vmatprep.subr.mxu0 0.0
        %2056 = vmatpush1.msra.mxu0 0.0
        %2057 = vmatprep.subr.mxu0 0.0
        %2058 = vmatpush1.msra.mxu0 0.0
        %2059 = vmatprep.subr.mxu0 0.0
        %2060 = vmatpush1.msra.mxu0 0.0
        %2061 = vmatprep.subr.mxu0 0.0
        %2062 = vmatpush1.msra.mxu0 0.0
        %2063 = vmatprep.subr.mxu0 0.0
        %2064 = vmatpush1.msra.mxu0 0.0
        %2065 = vmatprep.subr.mxu0 0.0
        %2066 = vmatpush1.msra.mxu0 0.0
        %2067 = vmatprep.subr.mxu0 0.0
        %2068 = vmatpush1.msra.mxu0 0.0
        %2069 = vmatprep.subr.mxu0 0.0
        %2070 = vmatpush1.msra.mxu0 0.0
        %2071 = vmatprep.subr.mxu0 0.0
        %2072 = vmatpush1.msra.mxu0 0.0
        %2073 = vmatprep.subr.mxu0 0.0
        %2074 = vmatpush1.msra.mxu0 0.0
        %2075 = vmatprep.subr.mxu0 0.0
        %2076 = vmatpush1.msra.mxu0 0.0
        %2077 = vmatprep.subr.mxu0 0.0
        %2078 = vmatpush1.msra.mxu0 0.0
        %2079 = vmatprep.subr.mxu0 0.0
        %2080 = vmatpush1.msra.mxu0 0.0
        %2081 = vmatprep.subr.mxu0 0.0
        %2082 = vmatpush1.msra.mxu0 0.0
        %2083 = vmatprep.subr.mxu0 0.0
        %2084 = vmatpush1.msra.mxu0 0.0
        %2085 = vmatprep.subr.mxu0 0.0
        %2086 = vmatpush1.msra.mxu0 0.0
        %2087 = vmatprep.subr.mxu0 0.0
        %2088 = vmatpush1.msra.mxu0 0.0
        %2089 = vmatprep.mubr.f32.mxu0 0.0
        %v2090 = vand.u32 %v1684, 4294901760
        %2091 = vmatmul.mubr.f32.gmra.mrb[0].mxu0 %v2090
        %v2092 = vpop.f32.mrb[0].mxu0
        %v2093 = vadd.f32 %v2010, %v2092
        %v2094 = vpop.f32.mrb[0].mxu0
        %2095 = vdwg.mxu0
        %2096 = vmatprep.subr.mxu0 0.0
        %v2097 = vand.u32 %v1676, 4294901760
        %2098 = vmatpush1.msra.mxu0 %v2097
        %2099 = vmatprep.subr.mxu0 0.0
        %v2100 = vand.u32 %v1677, 4294901760
        %2101 = vmatpush1.msra.mxu0 %v2100
        %2102 = vmatprep.subr.mxu0 0.0
        %v2103 = vand.u32 %v1678, 4294901760
        %2104 = vmatpush1.msra.mxu0 %v2103
        %2105 = vmatprep.subr.mxu0 0.0
        %v2106 = vand.u32 %v1679, 4294901760
        %2107 = vmatpush1.msra.mxu0 %v2106
        %2108 = vmatprep.subr.mxu0 0.0
        %2109 = vmatpush1.msra.mxu0 0.0
        %2110 = vmatprep.subr.mxu0 0.0
        %2111 = vmatpush1.msra.mxu0 0.0
        %2112 = vmatprep.subr.mxu0 0.0
        %2113 = vmatpush1.msra.mxu0 0.0
        %2114 = vmatprep.subr.mxu0 0.0
        %2115 = vmatpush1.msra.mxu0 0.0
        %2116 = vmatprep.subr.mxu0 0.0
        %2117 = vmatpush1.msra.mxu0 0.0
        %2118 = vmatprep.subr.mxu0 0.0
        %2119 = vmatpush1.msra.mxu0 0.0
        %2120 = vmatprep.subr.mxu0 0.0
        %2121 = vmatpush1.msra.mxu0 0.0
        %2122 = vmatprep.subr.mxu0 0.0
        %2123 = vmatpush1.msra.mxu0 0.0
        %2124 = vmatprep.subr.mxu0 0.0
        %2125 = vmatpush1.msra.mxu0 0.0
        %2126 = vmatprep.subr.mxu0 0.0
        %2127 = vmatpush1.msra.mxu0 0.0
        %2128 = vmatprep.subr.mxu0 0.0
        %2129 = vmatpush1.msra.mxu0 0.0
        %2130 = vmatprep.subr.mxu0 0.0
        %2131 = vmatpush1.msra.mxu0 0.0
        %2132 = vmatprep.subr.mxu0 0.0
        %2133 = vmatpush1.msra.mxu0 0.0
        %2134 = vmatprep.subr.mxu0 0.0
        %2135 = vmatpush1.msra.mxu0 0.0
        %2136 = vmatprep.subr.mxu0 0.0
        %2137 = vmatpush1.msra.mxu0 0.0
        %2138 = vmatprep.subr.mxu0 0.0
        %2139 = vmatpush1.msra.mxu0 0.0
        %2140 = vmatprep.subr.mxu0 0.0
        %2141 = vmatpush1.msra.mxu0 0.0
        %2142 = vmatprep.subr.mxu0 0.0
        %2143 = vmatpush1.msra.mxu0 0.0
        %2144 = vmatprep.subr.mxu0 0.0
        %2145 = vmatpush1.msra.mxu0 0.0
        %2146 = vmatprep.subr.mxu0 0.0
        %2147 = vmatpush1.msra.mxu0 0.0
        %2148 = vmatprep.subr.mxu0 0.0
        %2149 = vmatpush1.msra.mxu0 0.0
        %2150 = vmatprep.subr.mxu0 0.0
        %2151 = vmatpush1.msra.mxu0 0.0
        %2152 = vmatprep.subr.mxu0 0.0
        %2153 = vmatpush1.msra.mxu0 0.0
        %2154 = vmatprep.subr.mxu0 0.0
        %2155 = vmatpush1.msra.mxu0 0.0
        %2156 = vmatprep.subr.mxu0 0.0
        %2157 = vmatpush1.msra.mxu0 0.0
        %2158 = vmatprep.subr.mxu0 0.0
        %2159 = vmatpush1.msra.mxu0 0.0
        %2160 = vmatprep.subr.mxu0 0.0
        %2161 = vmatpush1.msra.mxu0 0.0
        %2162 = vmatprep.subr.mxu0 0.0
        %2163 = vmatpush1.msra.mxu0 0.0
        %2164 = vmatprep.mubr.f32.mxu0 0.0
        %v2165 = vand.u32 %v1684, 4294901760
        %2166 = vmatmul.mubr.f32.gmra.mrb[0].mxu0 %v2165
        %v2167 = vpop.f32.mrb[0].mxu0
        %v2168 = vadd.f32 %v2093, %v2167
        %v2169 = vpop.f32.mrb[0].mxu0
        %2170 = vdwg.mxu0
        %v2171 = vsub.f32 0.0, %v2168
        %v2172 = vmul.f32 %v2171, 1.442695
        %v2173 = vpow.pop %v2172
        %v2174 = vadd.f32 %v2173, 1.0
        %v2175 = vrcp.pop %v2174
        %v2176 = vmul.f32 1.0, %v2175
        %vm2177 = vcmask 516096
        %2178 = vst.msk [vmem:[%s303] sm:$0x1] %vm2177, %v2176
        %s2179 = sand.u32 %s169, 1
        %s2180 = scalar_lea.sflag [#allocation5], %s2179
        %s2181 = sand.u32 %s169, 1
        %s2182 = scalar_lea.vmem [#allocation9], %s2181
        // Predicated region
        $region57: #{tpu_custom_call.1} parent=43 // pred_check
          %p2183 = pneg %p179
        $region58: #{tpu_custom_call.1} parent=43 // pred_check_branch
          %2185 = sbr.rel (%p2183) target = $region60
        $region59: #{tpu_custom_call.1} parent=43 // pred_region
          %s2187 = ssub.s32 16, 16
          %2188 = vsyncadd %s2180, %s2187
          %s2189 = smul.addr %s25, 16
          %s2190 = scalar_lea.hbm %s6, %s2189
          %s2192 = sshll.u32 %s2182, 4
          %s2193 = int_to_ptr.vmem [resolvable:$true] %s2192
          %2195 = dma.vmem_to_hbm [thread:$0]  %s2193, 16, %s2190, %s2180
        $region60: #{tpu_custom_call.1} parent=43 // pred_fallthru
          _
      $region44: #{tpu_custom_call.1} parent=5 // pred_fallthru
        _
      %p2196 = scmp.le.s32.totalorder 2, %s20
      // Predicated region
      $region61: #{tpu_custom_call.1} parent=5 // pred_check
        %p2197 = pneg %p2196
      $region62: #{tpu_custom_call.1} parent=5 // pred_check_branch
        %2199 = sbr.rel (%p2197) target = $region64
      $region63: #{tpu_custom_call.1} parent=5 // pred_region
        %s2200 = ssub.s32 %s20, 2
        // Predicated region
        $region65: #{tpu_custom_call.1} parent=63 // pred_check
          %p2201 = pneg %p185
        $region66: #{tpu_custom_call.1} parent=63 // pred_check_branch
          %2203 = sbr.rel (%p2201) target = $region68
        $region67: #{tpu_custom_call.1} parent=63 // pred_region
          %s2204 = sand.u32 %s170, 1
          %s2205 = scalar_lea.sflag [#allocation5], %s2204
          %s2206 = sand.u32 %s170, 1
          %s2207 = scalar_lea.vmem [#allocation9], %s2206
          %2208 = dma.done %s2205, 16
        $region68: #{tpu_custom_call.1} parent=63 // pred_fallthru
          _
      $region64: #{tpu_custom_call.1} parent=5 // pred_fallthru
        _
    $region6: #{tpu_custom_call.1} parent=1 // loop_footer
      %s24 = sadd.s32 1, %s20
    $region7: #{tpu_custom_call.1} parent=1 // loop_footer_branch
      %19 = sbr.rel target = $region3
    $region8: #{tpu_custom_call.1} parent=1 // loop_exit
      _
    %2209 = vsyncpa [#allocation4], 1
    %s2210 = scalar_lea.sflag [#allocation4], 1
    %2211 = vsyncpa %s2210, 1
    %2212 = vsyncpa [#allocation7], 1
    %2213 = vsyncpa [#allocation5], 1
    %s2214 = scalar_lea.sflag [#allocation5], 1
    %2215 = vsyncpa %s2214, 1

</llo_original>
